<compile_context>
chip_gen: v7x
topology: tpu7x:2x2x1
jax: 0.10.0
libtpu: 0.0.40
codegen_flags: <defaults>
</compile_context>

<pallas_src>
import numpy as np

import jax
import jax.numpy as jnp
from jax.experimental import pallas as pl
from jax.experimental.pallas import tpu as pltpu


# --------------------------- model configuration ---------------------------

VOCAB = 128
HIDDEN = 64
N_HEADS = 4
HEAD_DIM = HIDDEN // N_HEADS
FFN = 128
N_LAYERS = 2
MAX_POS = 64
N_TYPES = 2
LN_EPS = 1e-12  # BERT LayerNorm eps


# --------------------------- fused encoder kernel ---------------------------


def _layer_norm(h, g, b):
    mu = jnp.mean(h, axis=-1, keepdims=True)
    d = h - mu
    var = jnp.mean(d * d, axis=-1, keepdims=True)
    return d * jax.lax.rsqrt(var + LN_EPS) * g + b


def _gelu(x):
    # TODO(synk): BERT uses exact erf-GELU; tanh approximation used here.
    c = 0.7978845608028654  # sqrt(2/pi)
    return 0.5 * x * (1.0 + jnp.tanh(c * (x + 0.044715 * x * x * x)))


def _encoder_kernel(emb_ref, mask_ref, eg_ref, eb_ref,
                    wqkv_ref, bqkv_ref, wo_ref, bo_ref,
                    ln1g_ref, ln1b_ref, w1_ref, b1_ref,
                    w2_ref, b2_ref, ln2g_ref, ln2b_ref,
                    out_ref, x_scratch):
    """One transformer layer per grid step; activations stay resident in VMEM."""
    layer = pl.program_id(0)

    # Embedding LayerNorm (no-residual path) on the first grid step only.
    @pl.when(layer == 0)
    def _init():
        x_scratch[...] = _layer_norm(emb_ref[...], eg_ref[...], eb_ref[...])

    x = x_scratch[...]                                    # (S, H) f32
    x_bf = x.astype(jnp.bfloat16)

    # Fused QKV projection: one (S,H) x (H,3H) bf16 MXU pass, f32 accumulation.
    qkv = jnp.dot(x_bf, wqkv_ref[0],
                  preferred_element_type=jnp.float32) + bqkv_ref[0]   # (S, 3H)

    mask_bias = mask_ref[...]                             # (1, S) additive bias
    scale = 1.0 / float(np.sqrt(HEAD_DIM))

    # All heads inside one kernel invocation; lane-dense (S, H) context output.
    ctx_parts = []
    for h in range(N_HEADS):
        lo = h * HEAD_DIM
        qh = qkv[:, lo:lo + HEAD_DIM].astype(jnp.bfloat16)
        kh = qkv[:, HIDDEN + lo:HIDDEN + lo + HEAD_DIM].astype(jnp.bfloat16)
        vh = qkv[:, 2 * HIDDEN + lo:2 * HIDDEN + lo + HEAD_DIM].astype(jnp.bfloat16)
        # q . k^T via contraction over the head dim (no explicit transpose).
        s = jax.lax.dot_general(qh, kh, (((1,), (1,)), ((), ())),
                                preferred_element_type=jnp.float32)
        s = s * scale + mask_bias                         # (S, S) f32
        s = s - jnp.max(s, axis=-1, keepdims=True)        # padded rows still see
        p = jnp.exp(s)                                    # real keys -> no NaN
        denom = jnp.sum(p, axis=-1, keepdims=True)
        p = p * pl.reciprocal(denom, approx=True)         # EUP slot (free-ish)
        ctx_parts.append(jnp.dot(p.astype(jnp.bfloat16), vh,
                                 preferred_element_type=jnp.float32))
    ctx = jnp.concatenate(ctx_parts, axis=-1)             # (S, H) f32

    attn_out = jnp.dot(ctx.astype(jnp.bfloat16), wo_ref[0],
                       preferred_element_type=jnp.float32) + bo_ref[0]
    x = _layer_norm(attn_out + x, ln1g_ref[0], ln1b_ref[0])

    ff = jnp.dot(x.astype(jnp.bfloat16), w1_ref[0],
                 preferred_element_type=jnp.float32) + b1_ref[0]
    ff = _gelu(ff)
    ff = jnp.dot(ff.astype(jnp.bfloat16), w2_ref[0],
                 preferred_element_type=jnp.float32) + b2_ref[0]
    x = _layer_norm(ff + x, ln2g_ref[0], ln2b_ref[0])

    x_scratch[...] = x

    @pl.when(layer == pl.num_programs(0) - 1)
    def _finish():
        out_ref[...] = x


def bert_encoder(params, token_ids, token_type_ids, att_mask):
    """Fused BERT encoder: embedding gather (JAX glue) + every transformer
    layer in a single pallas_call (grid over layers, VMEM-resident activations).

    token_ids / token_type_ids: (S,) int32 (already padded to a multiple of 16)
    att_mask: (S,) float32 {0,1}
    """
    S = token_ids.shape[0]
    assert S <= MAX_POS
    emb = (jnp.take(params["word_emb"], token_ids, axis=0)
           + params["pos_emb"][:S]
           + jnp.take(params["type_emb"], token_type_ids, axis=0)).astype(jnp.float32)
    mask_bias = ((att_mask.astype(jnp.float32) - 1.0) * 1e9).reshape(1, S)

    layers = params["layers"]
    stk = lambda name: jnp.stack([lp[name] for lp in layers], axis=0)
    wqkv, bqkv = stk("wqkv"), stk("bqkv")
    wo, bo = stk("wo"), stk("bo")
    ln1g, ln1b = stk("ln1_g"), stk("ln1_b")
    w1, b1 = stk("w1"), stk("b1")
    w2, b2 = stk("w2"), stk("b2")
    ln2g, ln2b = stk("ln2_g"), stk("ln2_b")

    # Shared tensors: same block every layer.  Per-layer tensors: block index
    # follows the (single, "arbitrary") layer grid axis.
    full = lambda arr: pl.BlockSpec(tuple(arr.shape), lambda l: (0,) * arr.ndim)
    per_layer = lambda arr: pl.BlockSpec(
        (1,) + tuple(arr.shape[1:]), lambda l: (l,) + (0,) * (arr.ndim - 1))

    # TODO(synk): at real bert-base sizes, add an M-tile "parallel" grid axis
    # (megacore / v7x) and tile the 768x3072 FFN weights along N for 64 MiB VMEM.
    return pl.pallas_call(
        _encoder_kernel,
        out_shape=jax.ShapeDtypeStruct((S, HIDDEN), jnp.float32),
        grid=(N_LAYERS,),
        in_specs=[
            full(emb), full(mask_bias),
            full(params["emb_ln_g"]), full(params["emb_ln_b"]),
            per_layer(wqkv), per_layer(bqkv),
            per_layer(wo), per_layer(bo),
            per_layer(ln1g), per_layer(ln1b),
            per_layer(w1), per_layer(b1),
            per_layer(w2), per_layer(b2),
            per_layer(ln2g), per_layer(ln2b),
        ],
        out_specs=pl.BlockSpec((S, HIDDEN), lambda l: (0, 0)),
        scratch_shapes=[pltpu.VMEM((S, HIDDEN), jnp.float32)],
        compiler_params=pltpu.CompilerParams(
            dimension_semantics=("arbitrary",)),  # layers carry state -> sequential
    )(emb, mask_bias, params["emb_ln_g"], params["emb_ln_b"],
      wqkv, bqkv, wo, bo, ln1g, ln1b, w1, b1, w2, b2, ln2g, ln2b)


# --------------------------- synthetic parameters ---------------------------


def init_params(key):
    f32, bf16 = jnp.float32, jnp.bfloat16

    def nrm(k, shape, dtype):
        return (jax.random.normal(k, shape, dtype=f32) * 0.02).astype(dtype)

    keys = iter(jax.random.split(key, 3 + 4 * N_LAYERS))
    params = {
        # Embedding tables stay f32 (gathered with plain JAX).
        "word_emb": nrm(next(keys), (VOCAB, HIDDEN), f32),
        "pos_emb": nrm(next(keys), (MAX_POS, HIDDEN), f32),
        "type_emb": nrm(next(keys), (N_TYPES, HIDDEN), f32),
        "emb_ln_g": jnp.ones((1, HIDDEN), f32),
        "emb_ln_b": jnp.zeros((1, HIDDEN), f32),
        "layers": [],
    }
    for _ in range(N_LAYERS):
        params["layers"].append({
            # Matmul weights in bf16 (MXU-native); biases / LN params in f32.
            "wqkv": nrm(next(keys), (HIDDEN, 3 * HIDDEN), bf16),
            "bqkv": jnp.zeros((1, 3 * HIDDEN), f32),
            "wo": nrm(next(keys), (HIDDEN, HIDDEN), bf16),
            "bo": jnp.zeros((1, HIDDEN), f32),
            "ln1_g": jnp.ones((1, HIDDEN), f32),
            "ln1_b": jnp.zeros((1, HIDDEN), f32),
            "w1": nrm(next(keys), (HIDDEN, FFN), bf16),
            "b1": jnp.zeros((1, FFN), f32),
            "w2": nrm(next(keys), (FFN, HIDDEN), bf16),
            "b2": jnp.zeros((1, HIDDEN), f32),
            "ln2_g": jnp.ones((1, HIDDEN), f32),
            "ln2_b": jnp.zeros((1, HIDDEN), f32),
        })
    return params


# ------------------------------ forward wrapper ------------------------------


def spider_encoder_forward(params, token_ids, token_type_ids, att_mask,
                           q_len, col_lens, tab_lens):
    """Mirrors SpiderEncoderBertTruncated.forward (summarize_header='avg',
    rat_update = NoOpUpdate)."""
    S = int(token_ids.shape[0])

    # Pad the sequence to a sublane-friendly multiple of 16; padding keys are
    # disabled via the attention-mask bias and padded rows are sliced off.
    S_pad = ((S + 15) // 16) * 16
    pad = S_pad - S
    token_ids_p = jnp.pad(token_ids, (0, pad))
    token_type_p = jnp.pad(token_type_ids, (0, pad))
    att_mask_p = jnp.pad(att_mask, (0, pad))  # zeros -> masked out

    enc = bert_encoder(params, token_ids_p, token_type_p, att_mask_p)
    plm_output = enc[:S]

    # -- index bookkeeping exactly as in the PyTorch module --
    q_b = q_len
    col_b = q_b + int(sum(col_lens))
    question_indexes = list(range(q_b))[1:-1]
    column_indexes = np.cumsum([q_b] + list(col_lens[:-1])).tolist()
    table_indexes = np.cumsum([col_b] + list(tab_lens[:-1])).tolist()
    column_indexes_2 = np.cumsum([q_b - 2] + list(col_lens)).tolist()[1:]
    table_indexes_2 = np.cumsum([col_b - 2] + list(tab_lens)).tolist()[1:]
    assert all(i2 >= i1 for i1, i2 in zip(column_indexes, column_indexes_2))
    assert all(i2 >= i1 for i1, i2 in zip(table_indexes, table_indexes_2))

    # Gathers + 'avg' header summarization: a handful of rows (< one vreg tile)
    # -> plain JAX; a dedicated pallas_call here would be pure launch overhead.
    q_enc = plm_output[jnp.asarray(question_indexes, jnp.int32)]
    col_enc = (plm_output[jnp.asarray(column_indexes, jnp.int32)]
               + plm_output[jnp.asarray(column_indexes_2, jnp.int32)]) * 0.5
    tab_enc = (plm_output[jnp.asarray(table_indexes, jnp.int32)]
               + plm_output[jnp.asarray(table_indexes_2, jnp.int32)]) * 0.5

    # rat_update: NoOpUpdate.forward_unbatched -> unsqueeze(1) then transpose(0,1)
    # TODO(synk): full RAT relational-transformer update not implemented
    # (rat_config = {'name': 'none'} variant reproduced here).
    q_new = q_enc[None]    # (1, n_q, H)
    c_new = col_enc[None]  # (1, n_cols, H)
    t_new = tab_enc[None]  # (1, n_tabs, H)
    return q_new, c_new, t_new


# ---------------------------------- main ------------------------------------

if __name__ == "__main__":
    key = jax.random.PRNGKey(0)
    k_params, k_tok = jax.random.split(key)

    params = init_params(k_params)

    # Synthetic tokenization result:
    #   question: [CLS] w1..w6 [SEP]           -> q_len = 8
    #   columns : 3 columns of token lengths [3, 2, 3]
    #   tables  : 2 tables  of token lengths [2, 2]
    q_len = 8
    col_lens = [3, 2, 3]
    tab_lens = [2, 2]
    S = q_len + sum(col_lens) + sum(tab_lens)  # 20

    token_ids = jax.random.randint(k_tok, (S,), 0, VOCAB, dtype=jnp.int32)
    token_type_ids = jnp.zeros((S,), jnp.int32)  # bert_token_type=False -> zeros
    att_mask = jnp.ones((S,), jnp.float32)       # batch of 1 -> no padding

    q_new, c_new, t_new = spider_encoder_forward(
        params, token_ids, token_type_ids, att_mask, q_len, col_lens, tab_lens
    )
    jax.block_until_ready((q_new, c_new, t_new))

    assert q_new.shape == (1, q_len - 2, HIDDEN)
    assert c_new.shape == (1, len(col_lens), HIDDEN)
    assert t_new.shape == (1, len(tab_lens), HIDDEN)
    print("KERNEL_OK")
</pallas_src>

<mosaic_0001>
module attributes {stable_mosaic.version = 11 : i64} {
  func.func @_encoder_kernel(%arg0: i32, %arg1: memref<32x64xf32, #tpu.memory_space<vmem>>, %arg2: memref<1x32xf32, #tpu.memory_space<vmem>>, %arg3: memref<1x64xf32, #tpu.memory_space<vmem>>, %arg4: memref<1x64xf32, #tpu.memory_space<vmem>>, %arg5: memref<1x64x192xbf16, #tpu.memory_space<vmem>>, %arg6: memref<1x1x192xf32, #tpu.memory_space<vmem>>, %arg7: memref<1x64x64xbf16, #tpu.memory_space<vmem>>, %arg8: memref<1x1x64xf32, #tpu.memory_space<vmem>>, %arg9: memref<1x1x64xf32, #tpu.memory_space<vmem>>, %arg10: memref<1x1x64xf32, #tpu.memory_space<vmem>>, %arg11: memref<1x64x128xbf16, #tpu.memory_space<vmem>>, %arg12: memref<1x1x128xf32, #tpu.memory_space<vmem>>, %arg13: memref<1x128x64xbf16, #tpu.memory_space<vmem>>, %arg14: memref<1x1x64xf32, #tpu.memory_space<vmem>>, %arg15: memref<1x1x64xf32, #tpu.memory_space<vmem>>, %arg16: memref<1x1x64xf32, #tpu.memory_space<vmem>>, %arg17: memref<32x64xf32, #tpu.memory_space<vmem>>, %arg18: memref<32x64xf32, #tpu.memory_space<vmem>>) attributes {dimension_semantics = [#tpu.dimension_semantics<arbitrary>], iteration_bounds = array<i64: 2>, scalar_prefetch = 0 : i64, scratch_operands = 1 : i64, tpu.core_type = #tpu.core_type<tc>, window_params = [{pipeline_mode = #tpu.pipeline_mode<synchronous>, transform_indices = @transform_0, window_bounds = array<i64: 32, 64>}, {pipeline_mode = #tpu.pipeline_mode<synchronous>, transform_indices = @transform_1, window_bounds = array<i64: 1, 32>}, {pipeline_mode = #tpu.pipeline_mode<synchronous>, transform_indices = @transform_2, window_bounds = array<i64: 1, 64>}, {pipeline_mode = #tpu.pipeline_mode<synchronous>, transform_indices = @transform_3, window_bounds = array<i64: 1, 64>}, {transform_indices = @transform_4, window_bounds = array<i64: 1, 64, 192>}, {transform_indices = @transform_5, window_bounds = array<i64: 1, 1, 192>}, {transform_indices = @transform_6, window_bounds = array<i64: 1, 64, 64>}, {transform_indices = @transform_7, window_bounds = array<i64: 1, 1, 64>}, {transform_indices = @transform_8, window_bounds = array<i64: 1, 1, 64>}, {transform_indices = @transform_9, window_bounds = array<i64: 1, 1, 64>}, {transform_indices = @transform_10, window_bounds = array<i64: 1, 64, 128>}, {transform_indices = @transform_11, window_bounds = array<i64: 1, 1, 128>}, {transform_indices = @transform_12, window_bounds = array<i64: 1, 128, 64>}, {transform_indices = @transform_13, window_bounds = array<i64: 1, 1, 64>}, {transform_indices = @transform_14, window_bounds = array<i64: 1, 1, 64>}, {transform_indices = @transform_15, window_bounds = array<i64: 1, 1, 64>}, {pipeline_mode = #tpu.pipeline_mode<synchronous>, transform_indices = @transform_16, window_bounds = array<i64: 32, 64>}]} {
    %c0_i32 = arith.constant 0 : i32
    %0 = arith.cmpi eq, %arg0, %c0_i32 : i32
    %1 = arith.extui %0 : i1 to i32
    %c0_i32_0 = arith.constant 0 : i32
    %2 = arith.cmpi ne, %1, %c0_i32_0 : i32
    scf.if %2 {
      %c0_80 = arith.constant 0 : index
      %c0_81 = arith.constant 0 : index
      %197 = vector.load %arg1[%c0_80, %c0_81] : memref<32x64xf32, #tpu.memory_space<vmem>>, vector<32x64xf32>
      %c0_82 = arith.constant 0 : index
      %c0_83 = arith.constant 0 : index
      %198 = vector.load %arg3[%c0_82, %c0_83] : memref<1x64xf32, #tpu.memory_space<vmem>>, vector<1x64xf32>
      %c0_84 = arith.constant 0 : index
      %c0_85 = arith.constant 0 : index
      %199 = vector.load %arg4[%c0_84, %c0_85] : memref<1x64xf32, #tpu.memory_space<vmem>>, vector<1x64xf32>
      %cst_86 = arith.constant dense<0.000000e+00> : vector<32xf32>
      %200 = vector.multi_reduction <add>, %197, %cst_86 [1] : vector<32x64xf32> to vector<32xf32>
      %201 = vector.shape_cast %200 : vector<32xf32> to vector<32x1xf32>
      %cst_87 = arith.constant 6.400000e+01 : f32
      %202 = vector.broadcast %cst_87 : f32 to vector<32x1xf32>
      %203 = arith.divf %201, %202 : vector<32x1xf32>
      %204 = vector.broadcast %203 : vector<32x1xf32> to vector<32x64xf32>
      %205 = arith.subf %197, %204 : vector<32x64xf32>
      %206 = arith.mulf %205, %205 : vector<32x64xf32>
      %cst_88 = arith.constant dense<0.000000e+00> : vector<32xf32>
      %207 = vector.multi_reduction <add>, %206, %cst_88 [1] : vector<32x64xf32> to vector<32xf32>
      %208 = vector.shape_cast %207 : vector<32xf32> to vector<32x1xf32>
      %cst_89 = arith.constant 6.400000e+01 : f32
      %209 = vector.broadcast %cst_89 : f32 to vector<32x1xf32>
      %210 = arith.divf %208, %209 : vector<32x1xf32>
      %cst_90 = arith.constant 9.99999996E-13 : f32
      %211 = vector.broadcast %cst_90 : f32 to vector<32x1xf32>
      %212 = arith.addf %210, %211 : vector<32x1xf32>
      %213 = math.rsqrt %212 : vector<32x1xf32>
      %214 = vector.broadcast %213 : vector<32x1xf32> to vector<32x64xf32>
      %215 = arith.mulf %205, %214 : vector<32x64xf32>
      %216 = vector.broadcast %198 : vector<1x64xf32> to vector<32x64xf32>
      %217 = arith.mulf %215, %216 : vector<32x64xf32>
      %218 = vector.broadcast %199 : vector<1x64xf32> to vector<32x64xf32>
      %219 = arith.addf %217, %218 : vector<32x64xf32>
      %c0_91 = arith.constant 0 : index
      %c0_92 = arith.constant 0 : index
      %220 = vector.load %arg18[%c0_91, %c0_92] : memref<32x64xf32, #tpu.memory_space<vmem>>, vector<32x64xf32>
      tpu.vector_store %arg18[%c0_91, %c0_92], %219 {strides = array<i32>} : memref<32x64xf32, #tpu.memory_space<vmem>>, vector<32x64xf32>,
    } else {
    }
    %c0 = arith.constant 0 : index
    %c0_1 = arith.constant 0 : index
    %3 = vector.load %arg18[%c0, %c0_1] : memref<32x64xf32, #tpu.memory_space<vmem>>, vector<32x64xf32>
    %4 = arith.truncf %3 : vector<32x64xf32> to vector<32x64xbf16>
    %c0_2 = arith.constant 0 : index
    %c0_3 = arith.constant 0 : index
    %c0_4 = arith.constant 0 : index
    %5 = vector.load %arg5[%c0_2, %c0_3, %c0_4] : memref<1x64x192xbf16, #tpu.memory_space<vmem>>, vector<1x64x192xbf16>
    %6 = vector.shape_cast %5 : vector<1x64x192xbf16> to vector<64x192xbf16>
    %cst = arith.constant dense<0.000000e+00> : vector<32x192xf32>
    %7 = tpu.matmul %4, %6, %cst {dimension_numbers = #tpu.dot_dimension_numbers<[1], [0], [0], [1], [0, 0, 1, 1], [], []>} : vector<32x64xbf16>, vector<64x192xbf16>, vector<32x192xf32> -> vector<32x192xf32>
    %c0_5 = arith.constant 0 : index
    %c0_6 = arith.constant 0 : index
    %c0_7 = arith.constant 0 : index
    %8 = vector.load %arg6[%c0_5, %c0_6, %c0_7] : memref<1x1x192xf32, #tpu.memory_space<vmem>>, vector<1x1x192xf32>
    %9 = vector.shape_cast %8 : vector<1x1x192xf32> to vector<1x192xf32>
    %10 = vector.broadcast %9 : vector<1x192xf32> to vector<32x192xf32>
    %11 = arith.addf %7, %10 : vector<32x192xf32>
    %c0_8 = arith.constant 0 : index
    %c0_9 = arith.constant 0 : index
    %12 = vector.load %arg2[%c0_8, %c0_9] : memref<1x32xf32, #tpu.memory_space<vmem>>, vector<1x32xf32>
    %13 = vector.extract_strided_slice %11 {offsets = [0, 0], sizes = [32, 16], strides = [1, 1]} : vector<32x192xf32> to vector<32x16xf32>
    %14 = arith.truncf %13 : vector<32x16xf32> to vector<32x16xbf16>
    %15 = vector.extract_strided_slice %11 {offsets = [0, 64], sizes = [32, 16], strides = [1, 1]} : vector<32x192xf32> to vector<32x16xf32>
    %16 = arith.truncf %15 : vector<32x16xf32> to vector<32x16xbf16>
    %17 = vector.extract_strided_slice %11 {offsets = [0, 128], sizes = [32, 16], strides = [1, 1]} : vector<32x192xf32> to vector<32x16xf32>
    %18 = arith.truncf %17 : vector<32x16xf32> to vector<32x16xbf16>
    %cst_10 = arith.constant dense<0.000000e+00> : vector<32x32xf32>
    %19 = tpu.matmul %14, %16, %cst_10 {dimension_numbers = #tpu.dot_dimension_numbers<[1], [1], [0], [0], [0, 0, 1, 0], [], []>} : vector<32x16xbf16>, vector<32x16xbf16>, vector<32x32xf32> -> vector<32x32xf32>
    %cst_11 = arith.constant 2.500000e-01 : f32
    %20 = vector.broadcast %cst_11 : f32 to vector<32x32xf32>
    %21 = arith.mulf %19, %20 : vector<32x32xf32>
    %22 = vector.broadcast %12 : vector<1x32xf32> to vector<32x32xf32>
    %23 = arith.addf %21, %22 : vector<32x32xf32>
    %cst_12 = arith.constant dense<0xFF800000> : vector<32xf32>
    %24 = vector.multi_reduction <maximumf>, %23, %cst_12 [1] : vector<32x32xf32> to vector<32xf32>
    %25 = vector.shape_cast %24 : vector<32xf32> to vector<32x1xf32>
    %26 = vector.broadcast %25 : vector<32x1xf32> to vector<32x32xf32>
    %27 = arith.subf %23, %26 : vector<32x32xf32>
    %28 = math.exp %27 : vector<32x32xf32>
    %cst_13 = arith.constant dense<0.000000e+00> : vector<32xf32>
    %29 = vector.multi_reduction <add>, %28, %cst_13 [1] : vector<32x32xf32> to vector<32xf32>
    %30 = vector.shape_cast %29 : vector<32xf32> to vector<32x1xf32>
    %31 = tpu.reciprocal %30 {approx = true} : vector<32x1xf32> -> vector<32x1xf32>
    %32 = vector.broadcast %31 : vector<32x1xf32> to vector<32x32xf32>
    %33 = arith.mulf %28, %32 : vector<32x32xf32>
    %34 = arith.truncf %33 : vector<32x32xf32> to vector<32x32xbf16>
    %cst_14 = arith.constant dense<0.000000e+00> : vector<32x16xf32>
    %35 = tpu.matmul %34, %18, %cst_14 {dimension_numbers = #tpu.dot_dimension_numbers<[1], [0], [0], [1], [0, 0, 1, 1], [], []>} : vector<32x32xbf16>, vector<32x16xbf16>, vector<32x16xf32> -> vector<32x16xf32>
    %36 = vector.extract_strided_slice %11 {offsets = [0, 16], sizes = [32, 16], strides = [1, 1]} : vector<32x192xf32> to vector<32x16xf32>
    %37 = arith.truncf %36 : vector<32x16xf32> to vector<32x16xbf16>
    %38 = vector.extract_strided_slice %11 {offsets = [0, 80], sizes = [32, 16], strides = [1, 1]} : vector<32x192xf32> to vector<32x16xf32>
    %39 = arith.truncf %38 : vector<32x16xf32> to vector<32x16xbf16>
    %40 = vector.extract_strided_slice %11 {offsets = [0, 144], sizes = [32, 16], strides = [1, 1]} : vector<32x192xf32> to vector<32x16xf32>
    %41 = arith.truncf %40 : vector<32x16xf32> to vector<32x16xbf16>
    %cst_15 = arith.constant dense<0.000000e+00> : vector<32x32xf32>
    %42 = tpu.matmul %37, %39, %cst_15 {dimension_numbers = #tpu.dot_dimension_numbers<[1], [1], [0], [0], [0, 0, 1, 0], [], []>} : vector<32x16xbf16>, vector<32x16xbf16>, vector<32x32xf32> -> vector<32x32xf32>
    %cst_16 = arith.constant 2.500000e-01 : f32
    %43 = vector.broadcast %cst_16 : f32 to vector<32x32xf32>
    %44 = arith.mulf %42, %43 : vector<32x32xf32>
    %45 = vector.broadcast %12 : vector<1x32xf32> to vector<32x32xf32>
    %46 = arith.addf %44, %45 : vector<32x32xf32>
    %cst_17 = arith.constant dense<0xFF800000> : vector<32xf32>
    %47 = vector.multi_reduction <maximumf>, %46, %cst_17 [1] : vector<32x32xf32> to vector<32xf32>
    %48 = vector.shape_cast %47 : vector<32xf32> to vector<32x1xf32>
    %49 = vector.broadcast %48 : vector<32x1xf32> to vector<32x32xf32>
    %50 = arith.subf %46, %49 : vector<32x32xf32>
    %51 = math.exp %50 : vector<32x32xf32>
    %cst_18 = arith.constant dense<0.000000e+00> : vector<32xf32>
    %52 = vector.multi_reduction <add>, %51, %cst_18 [1] : vector<32x32xf32> to vector<32xf32>
    %53 = vector.shape_cast %52 : vector<32xf32> to vector<32x1xf32>
    %54 = tpu.reciprocal %53 {approx = true} : vector<32x1xf32> -> vector<32x1xf32>
    %55 = vector.broadcast %54 : vector<32x1xf32> to vector<32x32xf32>
    %56 = arith.mulf %51, %55 : vector<32x32xf32>
    %57 = arith.truncf %56 : vector<32x32xf32> to vector<32x32xbf16>
    %cst_19 = arith.constant dense<0.000000e+00> : vector<32x16xf32>
    %58 = tpu.matmul %57, %41, %cst_19 {dimension_numbers = #tpu.dot_dimension_numbers<[1], [0], [0], [1], [0, 0, 1, 1], [], []>} : vector<32x32xbf16>, vector<32x16xbf16>, vector<32x16xf32> -> vector<32x16xf32>
    %59 = vector.extract_strided_slice %11 {offsets = [0, 32], sizes = [32, 16], strides = [1, 1]} : vector<32x192xf32> to vector<32x16xf32>
    %60 = arith.truncf %59 : vector<32x16xf32> to vector<32x16xbf16>
    %61 = vector.extract_strided_slice %11 {offsets = [0, 96], sizes = [32, 16], strides = [1, 1]} : vector<32x192xf32> to vector<32x16xf32>
    %62 = arith.truncf %61 : vector<32x16xf32> to vector<32x16xbf16>
    %63 = vector.extract_strided_slice %11 {offsets = [0, 160], sizes = [32, 16], strides = [1, 1]} : vector<32x192xf32> to vector<32x16xf32>
    %64 = arith.truncf %63 : vector<32x16xf32> to vector<32x16xbf16>
    %cst_20 = arith.constant dense<0.000000e+00> : vector<32x32xf32>
    %65 = tpu.matmul %60, %62, %cst_20 {dimension_numbers = #tpu.dot_dimension_numbers<[1], [1], [0], [0], [0, 0, 1, 0], [], []>} : vector<32x16xbf16>, vector<32x16xbf16>, vector<32x32xf32> -> vector<32x32xf32>
    %cst_21 = arith.constant 2.500000e-01 : f32
    %66 = vector.broadcast %cst_21 : f32 to vector<32x32xf32>
    %67 = arith.mulf %65, %66 : vector<32x32xf32>
    %68 = vector.broadcast %12 : vector<1x32xf32> to vector<32x32xf32>
    %69 = arith.addf %67, %68 : vector<32x32xf32>
    %cst_22 = arith.constant dense<0xFF800000> : vector<32xf32>
    %70 = vector.multi_reduction <maximumf>, %69, %cst_22 [1] : vector<32x32xf32> to vector<32xf32>
    %71 = vector.shape_cast %70 : vector<32xf32> to vector<32x1xf32>
    %72 = vector.broadcast %71 : vector<32x1xf32> to vector<32x32xf32>
    %73 = arith.subf %69, %72 : vector<32x32xf32>
    %74 = math.exp %73 : vector<32x32xf32>
    %cst_23 = arith.constant dense<0.000000e+00> : vector<32xf32>
    %75 = vector.multi_reduction <add>, %74, %cst_23 [1] : vector<32x32xf32> to vector<32xf32>
    %76 = vector.shape_cast %75 : vector<32xf32> to vector<32x1xf32>
    %77 = tpu.reciprocal %76 {approx = true} : vector<32x1xf32> -> vector<32x1xf32>
    %78 = vector.broadcast %77 : vector<32x1xf32> to vector<32x32xf32>
    %79 = arith.mulf %74, %78 : vector<32x32xf32>
    %80 = arith.truncf %79 : vector<32x32xf32> to vector<32x32xbf16>
    %cst_24 = arith.constant dense<0.000000e+00> : vector<32x16xf32>
    %81 = tpu.matmul %80, %64, %cst_24 {dimension_numbers = #tpu.dot_dimension_numbers<[1], [0], [0], [1], [0, 0, 1, 1], [], []>} : vector<32x32xbf16>, vector<32x16xbf16>, vector<32x16xf32> -> vector<32x16xf32>
    %82 = vector.extract_strided_slice %11 {offsets = [0, 48], sizes = [32, 16], strides = [1, 1]} : vector<32x192xf32> to vector<32x16xf32>
    %83 = arith.truncf %82 : vector<32x16xf32> to vector<32x16xbf16>
    %84 = vector.extract_strided_slice %11 {offsets = [0, 112], sizes = [32, 16], strides = [1, 1]} : vector<32x192xf32> to vector<32x16xf32>
    %85 = arith.truncf %84 : vector<32x16xf32> to vector<32x16xbf16>
    %86 = vector.extract_strided_slice %11 {offsets = [0, 176], sizes = [32, 16], strides = [1, 1]} : vector<32x192xf32> to vector<32x16xf32>
    %87 = arith.truncf %86 : vector<32x16xf32> to vector<32x16xbf16>
    %cst_25 = arith.constant dense<0.000000e+00> : vector<32x32xf32>
    %88 = tpu.matmul %83, %85, %cst_25 {dimension_numbers = #tpu.dot_dimension_numbers<[1], [1], [0], [0], [0, 0, 1, 0], [], []>} : vector<32x16xbf16>, vector<32x16xbf16>, vector<32x32xf32> -> vector<32x32xf32>
    %cst_26 = arith.constant 2.500000e-01 : f32
    %89 = vector.broadcast %cst_26 : f32 to vector<32x32xf32>
    %90 = arith.mulf %88, %89 : vector<32x32xf32>
    %91 = vector.broadcast %12 : vector<1x32xf32> to vector<32x32xf32>
    %92 = arith.addf %90, %91 : vector<32x32xf32>
    %cst_27 = arith.constant dense<0xFF800000> : vector<32xf32>
    %93 = vector.multi_reduction <maximumf>, %92, %cst_27 [1] : vector<32x32xf32> to vector<32xf32>
    %94 = vector.shape_cast %93 : vector<32xf32> to vector<32x1xf32>
    %95 = vector.broadcast %94 : vector<32x1xf32> to vector<32x32xf32>
    %96 = arith.subf %92, %95 : vector<32x32xf32>
    %97 = math.exp %96 : vector<32x32xf32>
    %cst_28 = arith.constant dense<0.000000e+00> : vector<32xf32>
    %98 = vector.multi_reduction <add>, %97, %cst_28 [1] : vector<32x32xf32> to vector<32xf32>
    %99 = vector.shape_cast %98 : vector<32xf32> to vector<32x1xf32>
    %100 = tpu.reciprocal %99 {approx = true} : vector<32x1xf32> -> vector<32x1xf32>
    %101 = vector.broadcast %100 : vector<32x1xf32> to vector<32x32xf32>
    %102 = arith.mulf %97, %101 : vector<32x32xf32>
    %103 = arith.truncf %102 : vector<32x32xf32> to vector<32x32xbf16>
    %cst_29 = arith.constant dense<0.000000e+00> : vector<32x16xf32>
    %104 = tpu.matmul %103, %87, %cst_29 {dimension_numbers = #tpu.dot_dimension_numbers<[1], [0], [0], [1], [0, 0, 1, 1], [], []>} : vector<32x32xbf16>, vector<32x16xbf16>, vector<32x16xf32> -> vector<32x16xf32>
    %105 = tpu.concatenate %35, %58, %81, %104 in 1 : vector<32x16xf32>, vector<32x16xf32>, vector<32x16xf32>, vector<32x16xf32> -> vector<32x64xf32>
    %106 = arith.truncf %105 : vector<32x64xf32> to vector<32x64xbf16>
    %c0_30 = arith.constant 0 : index
    %c0_31 = arith.constant 0 : index
    %c0_32 = arith.constant 0 : index
    %107 = vector.load %arg7[%c0_30, %c0_31, %c0_32] : memref<1x64x64xbf16, #tpu.memory_space<vmem>>, vector<1x64x64xbf16>
    %108 = vector.shape_cast %107 : vector<1x64x64xbf16> to vector<64x64xbf16>
    %cst_33 = arith.constant dense<0.000000e+00> : vector<32x64xf32>
    %109 = tpu.matmul %106, %108, %cst_33 {dimension_numbers = #tpu.dot_dimension_numbers<[1], [0], [0], [1], [0, 0, 1, 1], [], []>} : vector<32x64xbf16>, vector<64x64xbf16>, vector<32x64xf32> -> vector<32x64xf32>
    %c0_34 = arith.constant 0 : index
    %c0_35 = arith.constant 0 : index
    %c0_36 = arith.constant 0 : index
    %110 = vector.load %arg8[%c0_34, %c0_35, %c0_36] : memref<1x1x64xf32, #tpu.memory_space<vmem>>, vector<1x1x64xf32>
    %111 = vector.shape_cast %110 : vector<1x1x64xf32> to vector<1x64xf32>
    %112 = vector.broadcast %111 : vector<1x64xf32> to vector<32x64xf32>
    %113 = arith.addf %109, %112 : vector<32x64xf32>
    %114 = arith.addf %113, %3 : vector<32x64xf32>
    %c0_37 = arith.constant 0 : index
    %c0_38 = arith.constant 0 : index
    %c0_39 = arith.constant 0 : index
    %115 = vector.load %arg9[%c0_37, %c0_38, %c0_39] : memref<1x1x64xf32, #tpu.memory_space<vmem>>, vector<1x1x64xf32>
    %116 = vector.shape_cast %115 : vector<1x1x64xf32> to vector<1x64xf32>
    %c0_40 = arith.constant 0 : index
    %c0_41 = arith.constant 0 : index
    %c0_42 = arith.constant 0 : index
    %117 = vector.load %arg10[%c0_40, %c0_41, %c0_42] : memref<1x1x64xf32, #tpu.memory_space<vmem>>, vector<1x1x64xf32>
    %118 = vector.shape_cast %117 : vector<1x1x64xf32> to vector<1x64xf32>
    %cst_43 = arith.constant dense<0.000000e+00> : vector<32xf32>
    %119 = vector.multi_reduction <add>, %114, %cst_43 [1] : vector<32x64xf32> to vector<32xf32>
    %120 = vector.shape_cast %119 : vector<32xf32> to vector<32x1xf32>
    %cst_44 = arith.constant 6.400000e+01 : f32
    %121 = vector.broadcast %cst_44 : f32 to vector<32x1xf32>
    %122 = arith.divf %120, %121 : vector<32x1xf32>
    %123 = vector.broadcast %122 : vector<32x1xf32> to vector<32x64xf32>
    %124 = arith.subf %114, %123 : vector<32x64xf32>
    %125 = arith.mulf %124, %124 : vector<32x64xf32>
    %cst_45 = arith.constant dense<0.000000e+00> : vector<32xf32>
    %126 = vector.multi_reduction <add>, %125, %cst_45 [1] : vector<32x64xf32> to vector<32xf32>
    %127 = vector.shape_cast %126 : vector<32xf32> to vector<32x1xf32>
    %cst_46 = arith.constant 6.400000e+01 : f32
    %128 = vector.broadcast %cst_46 : f32 to vector<32x1xf32>
    %129 = arith.divf %127, %128 : vector<32x1xf32>
    %cst_47 = arith.constant 9.99999996E-13 : f32
    %130 = vector.broadcast %cst_47 : f32 to vector<32x1xf32>
    %131 = arith.addf %129, %130 : vector<32x1xf32>
    %132 = math.rsqrt %131 : vector<32x1xf32>
    %133 = vector.broadcast %132 : vector<32x1xf32> to vector<32x64xf32>
    %134 = arith.mulf %124, %133 : vector<32x64xf32>
    %135 = vector.broadcast %116 : vector<1x64xf32> to vector<32x64xf32>
    %136 = arith.mulf %134, %135 : vector<32x64xf32>
    %137 = vector.broadcast %118 : vector<1x64xf32> to vector<32x64xf32>
    %138 = arith.addf %136, %137 : vector<32x64xf32>
    %139 = arith.truncf %138 : vector<32x64xf32> to vector<32x64xbf16>
    %c0_48 = arith.constant 0 : index
    %c0_49 = arith.constant 0 : index
    %c0_50 = arith.constant 0 : index
    %140 = vector.load %arg11[%c0_48, %c0_49, %c0_50] : memref<1x64x128xbf16, #tpu.memory_space<vmem>>, vector<1x64x128xbf16>
    %141 = vector.shape_cast %140 : vector<1x64x128xbf16> to vector<64x128xbf16>
    %cst_51 = arith.constant dense<0.000000e+00> : vector<32x128xf32>
    %142 = tpu.matmul %139, %141, %cst_51 {dimension_numbers = #tpu.dot_dimension_numbers<[1], [0], [0], [1], [0, 0, 1, 1], [], []>} : vector<32x64xbf16>, vector<64x128xbf16>, vector<32x128xf32> -> vector<32x128xf32>
    %c0_52 = arith.constant 0 : index
    %c0_53 = arith.constant 0 : index
    %c0_54 = arith.constant 0 : index
    %143 = vector.load %arg12[%c0_52, %c0_53, %c0_54] : memref<1x1x128xf32, #tpu.memory_space<vmem>>, vector<1x1x128xf32>
    %144 = vector.shape_cast %143 : vector<1x1x128xf32> to vector<1x128xf32>
    %145 = vector.broadcast %144 : vector<1x128xf32> to vector<32x128xf32>
    %146 = arith.addf %142, %145 : vector<32x128xf32>
    %cst_55 = arith.constant 5.000000e-01 : f32
    %147 = vector.broadcast %cst_55 : f32 to vector<32x128xf32>
    %148 = arith.mulf %147, %146 : vector<32x128xf32>
    %cst_56 = arith.constant 4.471500e-02 : f32
    %149 = vector.broadcast %cst_56 : f32 to vector<32x128xf32>
    %150 = arith.mulf %149, %146 : vector<32x128xf32>
    %151 = arith.mulf %150, %146 : vector<32x128xf32>
    %152 = arith.mulf %151, %146 : vector<32x128xf32>
    %153 = arith.addf %146, %152 : vector<32x128xf32>
    %cst_57 = arith.constant 0.797884583 : f32
    %154 = vector.broadcast %cst_57 : f32 to vector<32x128xf32>
    %155 = arith.mulf %154, %153 : vector<32x128xf32>
    %156 = math.tanh %155 : vector<32x128xf32>
    %cst_58 = arith.constant 1.000000e+00 : f32
    %157 = vector.broadcast %cst_58 : f32 to vector<32x128xf32>
    %158 = arith.addf %157, %156 : vector<32x128xf32>
    %159 = arith.mulf %148, %158 : vector<32x128xf32>
    %160 = arith.truncf %159 : vector<32x128xf32> to vector<32x128xbf16>
    %c0_59 = arith.constant 0 : index
    %c0_60 = arith.constant 0 : index
    %c0_61 = arith.constant 0 : index
    %161 = vector.load %arg13[%c0_59, %c0_60, %c0_61] : memref<1x128x64xbf16, #tpu.memory_space<vmem>>, vector<1x128x64xbf16>
    %162 = vector.shape_cast %161 : vector<1x128x64xbf16> to vector<128x64xbf16>
    %cst_62 = arith.constant dense<0.000000e+00> : vector<32x64xf32>
    %163 = tpu.matmul %160, %162, %cst_62 {dimension_numbers = #tpu.dot_dimension_numbers<[1], [0], [0], [1], [0, 0, 1, 1], [], []>} : vector<32x128xbf16>, vector<128x64xbf16>, vector<32x64xf32> -> vector<32x64xf32>
    %c0_63 = arith.constant 0 : index
    %c0_64 = arith.constant 0 : index
    %c0_65 = arith.constant 0 : index
    %164 = vector.load %arg14[%c0_63, %c0_64, %c0_65] : memref<1x1x64xf32, #tpu.memory_space<vmem>>, vector<1x1x64xf32>
    %165 = vector.shape_cast %164 : vector<1x1x64xf32> to vector<1x64xf32>
    %166 = vector.broadcast %165 : vector<1x64xf32> to vector<32x64xf32>
    %167 = arith.addf %163, %166 : vector<32x64xf32>
    %168 = arith.addf %167, %138 : vector<32x64xf32>
    %c0_66 = arith.constant 0 : index
    %c0_67 = arith.constant 0 : index
    %c0_68 = arith.constant 0 : index
    %169 = vector.load %arg15[%c0_66, %c0_67, %c0_68] : memref<1x1x64xf32, #tpu.memory_space<vmem>>, vector<1x1x64xf32>
    %170 = vector.shape_cast %169 : vector<1x1x64xf32> to vector<1x64xf32>
    %c0_69 = arith.constant 0 : index
    %c0_70 = arith.constant 0 : index
    %c0_71 = arith.constant 0 : index
    %171 = vector.load %arg16[%c0_69, %c0_70, %c0_71] : memref<1x1x64xf32, #tpu.memory_space<vmem>>, vector<1x1x64xf32>
    %172 = vector.shape_cast %171 : vector<1x1x64xf32> to vector<1x64xf32>
    %cst_72 = arith.constant dense<0.000000e+00> : vector<32xf32>
    %173 = vector.multi_reduction <add>, %168, %cst_72 [1] : vector<32x64xf32> to vector<32xf32>
    %174 = vector.shape_cast %173 : vector<32xf32> to vector<32x1xf32>
    %cst_73 = arith.constant 6.400000e+01 : f32
    %175 = vector.broadcast %cst_73 : f32 to vector<32x1xf32>
    %176 = arith.divf %174, %175 : vector<32x1xf32>
    %177 = vector.broadcast %176 : vector<32x1xf32> to vector<32x64xf32>
    %178 = arith.subf %168, %177 : vector<32x64xf32>
    %179 = arith.mulf %178, %178 : vector<32x64xf32>
    %cst_74 = arith.constant dense<0.000000e+00> : vector<32xf32>
    %180 = vector.multi_reduction <add>, %179, %cst_74 [1] : vector<32x64xf32> to vector<32xf32>
    %181 = vector.shape_cast %180 : vector<32xf32> to vector<32x1xf32>
    %cst_75 = arith.constant 6.400000e+01 : f32
    %182 = vector.broadcast %cst_75 : f32 to vector<32x1xf32>
    %183 = arith.divf %181, %182 : vector<32x1xf32>
    %cst_76 = arith.constant 9.99999996E-13 : f32
    %184 = vector.broadcast %cst_76 : f32 to vector<32x1xf32>
    %185 = arith.addf %183, %184 : vector<32x1xf32>
    %186 = math.rsqrt %185 : vector<32x1xf32>
    %187 = vector.broadcast %186 : vector<32x1xf32> to vector<32x64xf32>
    %188 = arith.mulf %178, %187 : vector<32x64xf32>
    %189 = vector.broadcast %170 : vector<1x64xf32> to vector<32x64xf32>
    %190 = arith.mulf %188, %189 : vector<32x64xf32>
    %191 = vector.broadcast %172 : vector<1x64xf32> to vector<32x64xf32>
    %192 = arith.addf %190, %191 : vector<32x64xf32>
    %c0_77 = arith.constant 0 : index
    %c0_78 = arith.constant 0 : index
    %193 = vector.load %arg18[%c0_77, %c0_78] : memref<32x64xf32, #tpu.memory_space<vmem>>, vector<32x64xf32>
    tpu.vector_store %arg18[%c0_77, %c0_78], %192 {strides = array<i32>} : memref<32x64xf32, #tpu.memory_space<vmem>>, vector<32x64xf32>,
    %c1_i32 = arith.constant 1 : i32
    %194 = arith.cmpi eq, %arg0, %c1_i32 : i32
    %195 = arith.extui %194 : i1 to i32
    %c0_i32_79 = arith.constant 0 : i32
    %196 = arith.cmpi ne, %195, %c0_i32_79 : i32
    scf.if %196 {
      %c0_80 = arith.constant 0 : index
      %c0_81 = arith.constant 0 : index
      %197 = vector.load %arg17[%c0_80, %c0_81] : memref<32x64xf32, #tpu.memory_space<vmem>>, vector<32x64xf32>
      tpu.vector_store %arg17[%c0_80, %c0_81], %192 {strides = array<i32>} : memref<32x64xf32, #tpu.memory_space<vmem>>, vector<32x64xf32>,
    } else {
    }
    return
  }
  func.func @transform_0(%arg0: i32) -> (i32, i32) {
    %c0_i32 = arith.constant 0 : i32
    %c0_i32_0 = arith.constant 0 : i32
    %c0_i32_1 = arith.constant 0 : i32
    return %c0_i32, %c0_i32_0 : i32, i32
  }
  func.func @transform_1(%arg0: i32) -> (i32, i32) {
    %c0_i32 = arith.constant 0 : i32
    %c0_i32_0 = arith.constant 0 : i32
    %c0_i32_1 = arith.constant 0 : i32
    return %c0_i32, %c0_i32_0 : i32, i32
  }
  func.func @transform_2(%arg0: i32) -> (i32, i32) {
    %c0_i32 = arith.constant 0 : i32
    %c0_i32_0 = arith.constant 0 : i32
    %c0_i32_1 = arith.constant 0 : i32
    return %c0_i32, %c0_i32_0 : i32, i32
  }
  func.func @transform_3(%arg0: i32) -> (i32, i32) {
    %c0_i32 = arith.constant 0 : i32
    %c0_i32_0 = arith.constant 0 : i32
    %c0_i32_1 = arith.constant 0 : i32
    return %c0_i32, %c0_i32_0 : i32, i32
  }
  func.func @transform_4(%arg0: i32) -> (i32, i32, i32) {
    %c0_i32 = arith.constant 0 : i32
    %c0_i32_0 = arith.constant 0 : i32
    %c0_i32_1 = arith.constant 0 : i32
    return %arg0, %c0_i32, %c0_i32_0 : i32, i32, i32
  }
  func.func @transform_5(%arg0: i32) -> (i32, i32, i32) {
    %c0_i32 = arith.constant 0 : i32
    %c0_i32_0 = arith.constant 0 : i32
    %c0_i32_1 = arith.constant 0 : i32
    return %arg0, %c0_i32, %c0_i32_0 : i32, i32, i32
  }
  func.func @transform_6(%arg0: i32) -> (i32, i32, i32) {
    %c0_i32 = arith.constant 0 : i32
    %c0_i32_0 = arith.constant 0 : i32
    %c0_i32_1 = arith.constant 0 : i32
    return %arg0, %c0_i32, %c0_i32_0 : i32, i32, i32
  }
  func.func @transform_7(%arg0: i32) -> (i32, i32, i32) {
    %c0_i32 = arith.constant 0 : i32
    %c0_i32_0 = arith.constant 0 : i32
    %c0_i32_1 = arith.constant 0 : i32
    return %arg0, %c0_i32, %c0_i32_0 : i32, i32, i32
  }
  func.func @transform_8(%arg0: i32) -> (i32, i32, i32) {
    %c0_i32 = arith.constant 0 : i32
    %c0_i32_0 = arith.constant 0 : i32
    %c0_i32_1 = arith.constant 0 : i32
    return %arg0, %c0_i32, %c0_i32_0 : i32, i32, i32
  }
  func.func @transform_9(%arg0: i32) -> (i32, i32, i32) {
    %c0_i32 = arith.constant 0 : i32
    %c0_i32_0 = arith.constant 0 : i32
    %c0_i32_1 = arith.constant 0 : i32
    return %arg0, %c0_i32, %c0_i32_0 : i32, i32, i32
  }
  func.func @transform_10(%arg0: i32) -> (i32, i32, i32) {
    %c0_i32 = arith.constant 0 : i32
    %c0_i32_0 = arith.constant 0 : i32
    %c0_i32_1 = arith.constant 0 : i32
    return %arg0, %c0_i32, %c0_i32_0 : i32, i32, i32
  }
  func.func @transform_11(%arg0: i32) -> (i32, i32, i32) {
    %c0_i32 = arith.constant 0 : i32
    %c0_i32_0 = arith.constant 0 : i32
    %c0_i32_1 = arith.constant 0 : i32
    return %arg0, %c0_i32, %c0_i32_0 : i32, i32, i32
  }
  func.func @transform_12(%arg0: i32) -> (i32, i32, i32) {
    %c0_i32 = arith.constant 0 : i32
    %c0_i32_0 = arith.constant 0 : i32
    %c0_i32_1 = arith.constant 0 : i32
    return %arg0, %c0_i32, %c0_i32_0 : i32, i32, i32
  }
  func.func @transform_13(%arg0: i32) -> (i32, i32, i32) {
    %c0_i32 = arith.constant 0 : i32
    %c0_i32_0 = arith.constant 0 : i32
    %c0_i32_1 = arith.constant 0 : i32
    return %arg0, %c0_i32, %c0_i32_0 : i32, i32, i32
  }
  func.func @transform_14(%arg0: i32) -> (i32, i32, i32) {
    %c0_i32 = arith.constant 0 : i32
    %c0_i32_0 = arith.constant 0 : i32
    %c0_i32_1 = arith.constant 0 : i32
    return %arg0, %c0_i32, %c0_i32_0 : i32, i32, i32
  }
  func.func @transform_15(%arg0: i32) -> (i32, i32, i32) {
    %c0_i32 = arith.constant 0 : i32
    %c0_i32_0 = arith.constant 0 : i32
    %c0_i32_1 = arith.constant 0 : i32
    return %arg0, %c0_i32, %c0_i32_0 : i32, i32, i32
  }
  func.func @transform_16(%arg0: i32) -> (i32, i32) {
    %c0_i32 = arith.constant 0 : i32
    %c0_i32_0 = arith.constant 0 : i32
    %c0_i32_1 = arith.constant 0 : i32
    return %c0_i32, %c0_i32_0 : i32, i32
  }
}

</mosaic_0001>

<llo_original>
// kernel: tpu_custom_call.1
$region0: #{tpu_custom_call.1}
  #allocation0 [shape = 'u32[]', space=smem, size = 0x4, offset = 0x4, fixed_abs, tag = 'smem constant byte address 0x4 - core index']
  #allocation1 [shape = 'u32[144,128]{1,0:T(1,128)}', space=vmem, size = 0x12000, scoped, tag = 'internal scratch']
  #allocation2 [shape = 'f32[32,64]{1,0:T(8,128)}', space=vmem, size = 0x4000, scoped, tag = 'scratch operand']
  %s0 = inlined_call_operand.hbm [shape: f32[32,64], index: 0, kind: input, shape index: {}]
  %s1 = inlined_call_operand.hbm [shape: f32[1,32], index: 1, kind: input, shape index: {}]
  %s2 = inlined_call_operand.hbm [shape: f32[1,64], index: 2, kind: input, shape index: {}]
  %s3 = inlined_call_operand.hbm [shape: f32[1,64], index: 3, kind: input, shape index: {}]
  %s4 = inlined_call_operand.vmem [shape: bf16[2,64,192], index: 4, kind: input, shape index: {}]
  %s5 = inlined_call_operand.vmem [shape: f32[2,1,192], index: 5, kind: input, shape index: {}]
  %s6 = inlined_call_operand.vmem [shape: bf16[2,64,64], index: 6, kind: input, shape index: {}]
  %s7 = inlined_call_operand.vmem [shape: f32[2,1,64], index: 7, kind: input, shape index: {}]
  %s8 = inlined_call_operand.vmem [shape: f32[2,1,64], index: 8, kind: input, shape index: {}]
  %s9 = inlined_call_operand.vmem [shape: f32[2,1,64], index: 9, kind: input, shape index: {}]
  %s10 = inlined_call_operand.hbm [shape: bf16[2,64,128], index: 10, kind: input, shape index: {}]
  %s11 = inlined_call_operand.vmem [shape: f32[2,1,128], index: 11, kind: input, shape index: {}]
  %s12 = inlined_call_operand.vmem [shape: bf16[2,128,64], index: 12, kind: input, shape index: {}]
  %s13 = inlined_call_operand.vmem [shape: f32[2,1,64], index: 13, kind: input, shape index: {}]
  %s14 = inlined_call_operand.vmem [shape: f32[2,1,64], index: 14, kind: input, shape index: {}]
  %s15 = inlined_call_operand.vmem [shape: f32[2,1,64], index: 15, kind: input, shape index: {}]
  %s16 = inlined_call_operand.hbm [shape: f32[32,64], index: 16, kind: output, shape index: {}]
  %s17 = sld [smem:[#allocation0]]
  $region125: #{tpu_custom_call.1} parent=0
    _
  %s19 = ssub.s32 1, %s17
  %s20 = scalar_select 0, %s19, %s17
  $region1: #{tpu_custom_call.1} parent=0
    #allocation3 [shape = 'u8[16384]{0}', space=vmem, size = 0x4000, scoped, tag = 'input window, operand 0, single buffered']
    #allocation4 [shape = 's32[2]{0}', space=sflag, size = 0x8, scoped, tag = 'scoped memory for tpu_custom_call.1']
    #allocation5 [shape = 's32[2]{0}', space=sflag, size = 0x8, scoped, tag = 'scoped memory for tpu_custom_call.1']
    #allocation6 [shape = 'u8[512]{0}', space=vmem, size = 0x400, scoped, tag = 'input window, operand 1, single buffered']
    #allocation7 [shape = 's32[1]{0}', space=sflag, size = 0x4, scoped, tag = 'scoped memory for tpu_custom_call.1']
    #allocation8 [shape = 'u8[512]{0}', space=vmem, size = 0x400, scoped, tag = 'input window, operand 2, single buffered']
    #allocation9 [shape = 'u8[512]{0}', space=vmem, size = 0x400, scoped, tag = 'input window, operand 3, single buffered']
    #allocation10 [shape = 's32[1]{0}', space=sflag, size = 0x4, scoped, tag = 'scoped memory for tpu_custom_call.1']
    #allocation11 [shape = 'u8[32768]{0}', space=vmem, size = 0x8000, scoped, tag = 'input window, operand 10']
    #allocation12 [shape = 'u8[16384]{0}', space=vmem, size = 0x4000, scoped, tag = 'output window, operand 0, single buffered']
    %21 = vsyncpa [#allocation4], 0
    %22 = vsyncpa [#allocation7], 0
    %23 = vsyncpa [#allocation10], 0
    %24 = vsyncpa [#allocation5], 0
    loop: start=0, step=1, limit=4
    $region2: #{tpu_custom_call.1} parent=1 // loop_pre_header
      _
    $region3: #{tpu_custom_call.1} parent=1 // loop_header
      %s26 = sphi 0, %s30
      %p27 = scmp.ge.s32.totalorder %s26, 4
      %s34 = sphi 0, %s34
      %s36 = sphi 0, %s34
      %s37 = sphi 0, %s36
      %s51 = sphi 0, %s37
      %s55 = sphi 0, %s55
      %s57 = sphi 0, %s55
      %s58 = sphi 0, %s57
      %s72 = sphi 0, %s58
      %s76 = sphi 0, %s76
      %s78 = sphi 0, %s76
      %s79 = sphi 0, %s78
      %s93 = sphi 0, %s79
      %s97 = sphi 0, %s97
      %s99 = sphi 0, %s97
      %s100 = sphi 0, %s99
      %s114 = sphi 0, %s100
      %s120 = sphi 0, %s122
      %s123 = sphi 0, %s120
      %s124 = sphi 0, %s123
      %s140 = sphi 0, %s124
      %s146 = sphi 0, %s148
      %s149 = sphi 0, %s146
      %s150 = sphi 0, %s149
      %s166 = sphi 0, %s150
      %s172 = sphi 0, %s174
      %s175 = sphi 0, %s172
      %s176 = sphi 0, %s175
      %s192 = sphi 0, %s176
      %s198 = sphi 0, %s200
      %s201 = sphi 0, %s198
      %s202 = sphi 0, %s201
      %s218 = sphi 0, %s202
      %s224 = sphi 0, %s226
      %s227 = sphi 0, %s224
      %s228 = sphi 0, %s227
      %s244 = sphi 0, %s228
      %s250 = sphi 0, %s252
      %s253 = sphi 0, %s250
      %s254 = sphi 0, %s253
      %s270 = sphi 0, %s254
      %s276 = sphi 0, %s278
      %s279 = sphi 0, %s276
      %s280 = sphi 0, %s279
      %s296 = sphi 0, %s280
      %s302 = sphi 0, %s304
      %s305 = sphi 0, %s302
      %s306 = sphi 0, %s305
      %s322 = sphi 0, %s306
      %s328 = sphi 0, %s330
      %s331 = sphi 0, %s328
      %s332 = sphi 0, %s331
      %s348 = sphi 0, %s332
      %s354 = sphi 0, %s356
      %s357 = sphi 0, %s354
      %s358 = sphi 0, %s357
      %s374 = sphi 0, %s358
      %s380 = sphi 0, %s382
      %s383 = sphi 0, %s380
      %s384 = sphi 0, %s383
      %s400 = sphi 0, %s384
      %s406 = sphi 0, %s408
      %s409 = sphi 0, %s406
      %s410 = sphi 0, %s409
      %s426 = sphi 0, %s410
      %s430 = sphi 0, %s430
      %s432 = sphi 0, %s430
      %s433 = sphi 0, %s432
      %s447 = sphi 0, %s433
    $region4: #{tpu_custom_call.1} parent=1 // loop_header_branch
      %29 = sbr.rel (%p27) target = $region8
    $region5: #{tpu_custom_call.1} parent=1 // loop_body
      %s31 = ssub.s32 %s26, 1
      %s32 = ssub.s32 %s26, 2
      %s33 = sadd.s32 %s26, 1
      %s35 = sadd.s32 %s34, 1
      %p38 = scmp.eq.s32.totalorder %s26, 1
      %p39 = scmp.ne.s32.totalorder %s34, %s36
      %p40 = scmp.eq.s32.totalorder %s26, 0
      %p41 = por %p39, %p40
      %p42 = scmp.ne.s32.totalorder %s34, %s36
      %p43 = scmp.eq.s32.totalorder %s31, 1
      %p44 = por %p42, %p43
      %p45 = scmp.ne.s32.totalorder %s36, %s37
      %p46 = scmp.eq.s32.totalorder %s31, 0
      %p47 = por %p45, %p46
      %p48 = scmp.ne.s32.totalorder %s36, %s37
      %p49 = scmp.eq.s32.totalorder %s32, 1
      %p50 = por %p48, %p49
      %p52 = scmp.ne.s32.totalorder %s37, %s51
      %p53 = scmp.eq.s32.totalorder %s32, 0
      %p54 = por %p52, %p53
      %s56 = sadd.s32 %s55, 1
      %p59 = scmp.eq.s32.totalorder %s26, 1
      %p60 = scmp.ne.s32.totalorder %s55, %s57
      %p61 = scmp.eq.s32.totalorder %s26, 0
      %p62 = por %p60, %p61
      %p63 = scmp.ne.s32.totalorder %s55, %s57
      %p64 = scmp.eq.s32.totalorder %s31, 1
      %p65 = por %p63, %p64
      %p66 = scmp.ne.s32.totalorder %s57, %s58
      %p67 = scmp.eq.s32.totalorder %s31, 0
      %p68 = por %p66, %p67
      %p69 = scmp.ne.s32.totalorder %s57, %s58
      %p70 = scmp.eq.s32.totalorder %s32, 1
      %p71 = por %p69, %p70
      %p73 = scmp.ne.s32.totalorder %s58, %s72
      %p74 = scmp.eq.s32.totalorder %s32, 0
      %p75 = por %p73, %p74
      %s77 = sadd.s32 %s76, 1
      %p80 = scmp.eq.s32.totalorder %s26, 1
      %p81 = scmp.ne.s32.totalorder %s76, %s78
      %p82 = scmp.eq.s32.totalorder %s26, 0
      %p83 = por %p81, %p82
      %p84 = scmp.ne.s32.totalorder %s76, %s78
      %p85 = scmp.eq.s32.totalorder %s31, 1
      %p86 = por %p84, %p85
      %p87 = scmp.ne.s32.totalorder %s78, %s79
      %p88 = scmp.eq.s32.totalorder %s31, 0
      %p89 = por %p87, %p88
      %p90 = scmp.ne.s32.totalorder %s78, %s79
      %p91 = scmp.eq.s32.totalorder %s32, 1
      %p92 = por %p90, %p91
      %p94 = scmp.ne.s32.totalorder %s79, %s93
      %p95 = scmp.eq.s32.totalorder %s32, 0
      %p96 = por %p94, %p95
      %s98 = sadd.s32 %s97, 1
      %p101 = scmp.eq.s32.totalorder %s26, 1
      %p102 = scmp.ne.s32.totalorder %s97, %s99
      %p103 = scmp.eq.s32.totalorder %s26, 0
      %p104 = por %p102, %p103
      %p105 = scmp.ne.s32.totalorder %s97, %s99
      %p106 = scmp.eq.s32.totalorder %s31, 1
      %p107 = por %p105, %p106
      %p108 = scmp.ne.s32.totalorder %s99, %s100
      %p109 = scmp.eq.s32.totalorder %s31, 0
      %p110 = por %p108, %p109
      %p111 = scmp.ne.s32.totalorder %s99, %s100
      %p112 = scmp.eq.s32.totalorder %s32, 1
      %p113 = por %p111, %p112
      %p115 = scmp.ne.s32.totalorder %s100, %s114
      %p116 = scmp.eq.s32.totalorder %s32, 0
      %p117 = por %p115, %p116
      %s118 = ssub.s32 %s26, %s33
      %p119 = scmp.eq.s32.totalorder %s118, 0
      %s121 = sadd.s32 %s120, 1
      %s122 = scalar_select %p119, %s120, %s121
      %p125 = pneg %p119
      %p126 = scmp.eq.s32.totalorder %s26, 1
      %p127 = por %p125, %p126
      %p128 = scmp.ne.s32.totalorder %s120, %s123
      %p129 = scmp.eq.s32.totalorder %s26, 0
      %p130 = por %p128, %p129
      %p131 = scmp.ne.s32.totalorder %s120, %s123
      %p132 = scmp.eq.s32.totalorder %s31, 1
      %p133 = por %p131, %p132
      %p134 = scmp.ne.s32.totalorder %s123, %s124
      %p135 = scmp.eq.s32.totalorder %s31, 0
      %p136 = por %p134, %p135
      %p137 = scmp.ne.s32.totalorder %s123, %s124
      %p138 = scmp.eq.s32.totalorder %s32, 1
      %p139 = por %p137, %p138
      %p141 = scmp.ne.s32.totalorder %s124, %s140
      %p142 = scmp.eq.s32.totalorder %s32, 0
      %p143 = por %p141, %p142
      %s144 = ssub.s32 %s26, %s33
      %p145 = scmp.eq.s32.totalorder %s144, 0
      %s147 = sadd.s32 %s146, 1
      %s148 = scalar_select %p145, %s146, %s147
      %p151 = pneg %p145
      %p152 = scmp.eq.s32.totalorder %s26, 1
      %p153 = por %p151, %p152
      %p154 = scmp.ne.s32.totalorder %s146, %s149
      %p155 = scmp.eq.s32.totalorder %s26, 0
      %p156 = por %p154, %p155
      %p157 = scmp.ne.s32.totalorder %s146, %s149
      %p158 = scmp.eq.s32.totalorder %s31, 1
      %p159 = por %p157, %p158
      %p160 = scmp.ne.s32.totalorder %s149, %s150
      %p161 = scmp.eq.s32.totalorder %s31, 0
      %p162 = por %p160, %p161
      %p163 = scmp.ne.s32.totalorder %s149, %s150
      %p164 = scmp.eq.s32.totalorder %s32, 1
      %p165 = por %p163, %p164
      %p167 = scmp.ne.s32.totalorder %s150, %s166
      %p168 = scmp.eq.s32.totalorder %s32, 0
      %p169 = por %p167, %p168
      %s170 = ssub.s32 %s26, %s33
      %p171 = scmp.eq.s32.totalorder %s170, 0
      %s173 = sadd.s32 %s172, 1
      %s174 = scalar_select %p171, %s172, %s173
      %p177 = pneg %p171
      %p178 = scmp.eq.s32.totalorder %s26, 1
      %p179 = por %p177, %p178
      %p180 = scmp.ne.s32.totalorder %s172, %s175
      %p181 = scmp.eq.s32.totalorder %s26, 0
      %p182 = por %p180, %p181
      %p183 = scmp.ne.s32.totalorder %s172, %s175
      %p184 = scmp.eq.s32.totalorder %s31, 1
      %p185 = por %p183, %p184
      %p186 = scmp.ne.s32.totalorder %s175, %s176
      %p187 = scmp.eq.s32.totalorder %s31, 0
      %p188 = por %p186, %p187
      %p189 = scmp.ne.s32.totalorder %s175, %s176
      %p190 = scmp.eq.s32.totalorder %s32, 1
      %p191 = por %p189, %p190
      %p193 = scmp.ne.s32.totalorder %s176, %s192
      %p194 = scmp.eq.s32.totalorder %s32, 0
      %p195 = por %p193, %p194
      %s196 = ssub.s32 %s26, %s33
      %p197 = scmp.eq.s32.totalorder %s196, 0
      %s199 = sadd.s32 %s198, 1
      %s200 = scalar_select %p197, %s198, %s199
      %p203 = pneg %p197
      %p204 = scmp.eq.s32.totalorder %s26, 1
      %p205 = por %p203, %p204
      %p206 = scmp.ne.s32.totalorder %s198, %s201
      %p207 = scmp.eq.s32.totalorder %s26, 0
      %p208 = por %p206, %p207
      %p209 = scmp.ne.s32.totalorder %s198, %s201
      %p210 = scmp.eq.s32.totalorder %s31, 1
      %p211 = por %p209, %p210
      %p212 = scmp.ne.s32.totalorder %s201, %s202
      %p213 = scmp.eq.s32.totalorder %s31, 0
      %p214 = por %p212, %p213
      %p215 = scmp.ne.s32.totalorder %s201, %s202
      %p216 = scmp.eq.s32.totalorder %s32, 1
      %p217 = por %p215, %p216
      %p219 = scmp.ne.s32.totalorder %s202, %s218
      %p220 = scmp.eq.s32.totalorder %s32, 0
      %p221 = por %p219, %p220
      %s222 = ssub.s32 %s26, %s33
      %p223 = scmp.eq.s32.totalorder %s222, 0
      %s225 = sadd.s32 %s224, 1
      %s226 = scalar_select %p223, %s224, %s225
      %p229 = pneg %p223
      %p230 = scmp.eq.s32.totalorder %s26, 1
      %p231 = por %p229, %p230
      %p232 = scmp.ne.s32.totalorder %s224, %s227
      %p233 = scmp.eq.s32.totalorder %s26, 0
      %p234 = por %p232, %p233
      %p235 = scmp.ne.s32.totalorder %s224, %s227
      %p236 = scmp.eq.s32.totalorder %s31, 1
      %p237 = por %p235, %p236
      %p238 = scmp.ne.s32.totalorder %s227, %s228
      %p239 = scmp.eq.s32.totalorder %s31, 0
      %p240 = por %p238, %p239
      %p241 = scmp.ne.s32.totalorder %s227, %s228
      %p242 = scmp.eq.s32.totalorder %s32, 1
      %p243 = por %p241, %p242
      %p245 = scmp.ne.s32.totalorder %s228, %s244
      %p246 = scmp.eq.s32.totalorder %s32, 0
      %p247 = por %p245, %p246
      %s248 = ssub.s32 %s26, %s33
      %p249 = scmp.eq.s32.totalorder %s248, 0
      %s251 = sadd.s32 %s250, 1
      %s252 = scalar_select %p249, %s250, %s251
      %p255 = pneg %p249
      %p256 = scmp.eq.s32.totalorder %s26, 1
      %p257 = por %p255, %p256
      %p258 = scmp.ne.s32.totalorder %s250, %s253
      %p259 = scmp.eq.s32.totalorder %s26, 0
      %p260 = por %p258, %p259
      %p261 = scmp.ne.s32.totalorder %s250, %s253
      %p262 = scmp.eq.s32.totalorder %s31, 1
      %p263 = por %p261, %p262
      %p264 = scmp.ne.s32.totalorder %s253, %s254
      %p265 = scmp.eq.s32.totalorder %s31, 0
      %p266 = por %p264, %p265
      %p267 = scmp.ne.s32.totalorder %s253, %s254
      %p268 = scmp.eq.s32.totalorder %s32, 1
      %p269 = por %p267, %p268
      %p271 = scmp.ne.s32.totalorder %s254, %s270
      %p272 = scmp.eq.s32.totalorder %s32, 0
      %p273 = por %p271, %p272
      %s274 = ssub.s32 %s26, %s33
      %p275 = scmp.eq.s32.totalorder %s274, 0
      %s277 = sadd.s32 %s276, 1
      %s278 = scalar_select %p275, %s276, %s277
      %p281 = pneg %p275
      %p282 = scmp.eq.s32.totalorder %s26, 1
      %p283 = por %p281, %p282
      %p284 = scmp.ne.s32.totalorder %s276, %s279
      %p285 = scmp.eq.s32.totalorder %s26, 0
      %p286 = por %p284, %p285
      %p287 = scmp.ne.s32.totalorder %s276, %s279
      %p288 = scmp.eq.s32.totalorder %s31, 1
      %p289 = por %p287, %p288
      %p290 = scmp.ne.s32.totalorder %s279, %s280
      %p291 = scmp.eq.s32.totalorder %s31, 0
      %p292 = por %p290, %p291
      %p293 = scmp.ne.s32.totalorder %s279, %s280
      %p294 = scmp.eq.s32.totalorder %s32, 1
      %p295 = por %p293, %p294
      %p297 = scmp.ne.s32.totalorder %s280, %s296
      %p298 = scmp.eq.s32.totalorder %s32, 0
      %p299 = por %p297, %p298
      %s300 = ssub.s32 %s26, %s33
      %p301 = scmp.eq.s32.totalorder %s300, 0
      %s303 = sadd.s32 %s302, 1
      %s304 = scalar_select %p301, %s302, %s303
      %p307 = pneg %p301
      %p308 = scmp.eq.s32.totalorder %s26, 1
      %p309 = por %p307, %p308
      %p310 = scmp.ne.s32.totalorder %s302, %s305
      %p311 = scmp.eq.s32.totalorder %s26, 0
      %p312 = por %p310, %p311
      %p313 = scmp.ne.s32.totalorder %s302, %s305
      %p314 = scmp.eq.s32.totalorder %s31, 1
      %p315 = por %p313, %p314
      %p316 = scmp.ne.s32.totalorder %s305, %s306
      %p317 = scmp.eq.s32.totalorder %s31, 0
      %p318 = por %p316, %p317
      %p319 = scmp.ne.s32.totalorder %s305, %s306
      %p320 = scmp.eq.s32.totalorder %s32, 1
      %p321 = por %p319, %p320
      %p323 = scmp.ne.s32.totalorder %s306, %s322
      %p324 = scmp.eq.s32.totalorder %s32, 0
      %p325 = por %p323, %p324
      %s326 = ssub.s32 %s26, %s33
      %p327 = scmp.eq.s32.totalorder %s326, 0
      %s329 = sadd.s32 %s328, 1
      %s330 = scalar_select %p327, %s328, %s329
      %p333 = pneg %p327
      %p334 = scmp.eq.s32.totalorder %s26, 1
      %p335 = por %p333, %p334
      %p336 = scmp.ne.s32.totalorder %s328, %s331
      %p337 = scmp.eq.s32.totalorder %s26, 0
      %p338 = por %p336, %p337
      %p339 = scmp.ne.s32.totalorder %s328, %s331
      %p340 = scmp.eq.s32.totalorder %s31, 1
      %p341 = por %p339, %p340
      %p342 = scmp.ne.s32.totalorder %s331, %s332
      %p343 = scmp.eq.s32.totalorder %s31, 0
      %p344 = por %p342, %p343
      %p345 = scmp.ne.s32.totalorder %s331, %s332
      %p346 = scmp.eq.s32.totalorder %s32, 1
      %p347 = por %p345, %p346
      %p349 = scmp.ne.s32.totalorder %s332, %s348
      %p350 = scmp.eq.s32.totalorder %s32, 0
      %p351 = por %p349, %p350
      %s352 = ssub.s32 %s26, %s33
      %p353 = scmp.eq.s32.totalorder %s352, 0
      %s355 = sadd.s32 %s354, 1
      %s356 = scalar_select %p353, %s354, %s355
      %p359 = pneg %p353
      %p360 = scmp.eq.s32.totalorder %s26, 1
      %p361 = por %p359, %p360
      %p362 = scmp.ne.s32.totalorder %s354, %s357
      %p363 = scmp.eq.s32.totalorder %s26, 0
      %p364 = por %p362, %p363
      %p365 = scmp.ne.s32.totalorder %s354, %s357
      %p366 = scmp.eq.s32.totalorder %s31, 1
      %p367 = por %p365, %p366
      %p368 = scmp.ne.s32.totalorder %s357, %s358
      %p369 = scmp.eq.s32.totalorder %s31, 0
      %p370 = por %p368, %p369
      %p371 = scmp.ne.s32.totalorder %s357, %s358
      %p372 = scmp.eq.s32.totalorder %s32, 1
      %p373 = por %p371, %p372
      %p375 = scmp.ne.s32.totalorder %s358, %s374
      %p376 = scmp.eq.s32.totalorder %s32, 0
      %p377 = por %p375, %p376
      %s378 = ssub.s32 %s26, %s33
      %p379 = scmp.eq.s32.totalorder %s378, 0
      %s381 = sadd.s32 %s380, 1
      %s382 = scalar_select %p379, %s380, %s381
      %p385 = pneg %p379
      %p386 = scmp.eq.s32.totalorder %s26, 1
      %p387 = por %p385, %p386
      %p388 = scmp.ne.s32.totalorder %s380, %s383
      %p389 = scmp.eq.s32.totalorder %s26, 0
      %p390 = por %p388, %p389
      %p391 = scmp.ne.s32.totalorder %s380, %s383
      %p392 = scmp.eq.s32.totalorder %s31, 1
      %p393 = por %p391, %p392
      %p394 = scmp.ne.s32.totalorder %s383, %s384
      %p395 = scmp.eq.s32.totalorder %s31, 0
      %p396 = por %p394, %p395
      %p397 = scmp.ne.s32.totalorder %s383, %s384
      %p398 = scmp.eq.s32.totalorder %s32, 1
      %p399 = por %p397, %p398
      %p401 = scmp.ne.s32.totalorder %s384, %s400
      %p402 = scmp.eq.s32.totalorder %s32, 0
      %p403 = por %p401, %p402
      %s404 = ssub.s32 %s26, %s33
      %p405 = scmp.eq.s32.totalorder %s404, 0
      %s407 = sadd.s32 %s406, 1
      %s408 = scalar_select %p405, %s406, %s407
      %p411 = pneg %p405
      %p412 = scmp.eq.s32.totalorder %s26, 1
      %p413 = por %p411, %p412
      %p414 = scmp.ne.s32.totalorder %s406, %s409
      %p415 = scmp.eq.s32.totalorder %s26, 0
      %p416 = por %p414, %p415
      %p417 = scmp.ne.s32.totalorder %s406, %s409
      %p418 = scmp.eq.s32.totalorder %s31, 1
      %p419 = por %p417, %p418
      %p420 = scmp.ne.s32.totalorder %s409, %s410
      %p421 = scmp.eq.s32.totalorder %s31, 0
      %p422 = por %p420, %p421
      %p423 = scmp.ne.s32.totalorder %s409, %s410
      %p424 = scmp.eq.s32.totalorder %s32, 1
      %p425 = por %p423, %p424
      %p427 = scmp.ne.s32.totalorder %s410, %s426
      %p428 = scmp.eq.s32.totalorder %s32, 0
      %p429 = por %p427, %p428
      %s431 = sadd.s32 %s430, 1
      %p434 = scmp.eq.s32.totalorder %s26, 1
      %p435 = scmp.ne.s32.totalorder %s430, %s432
      %p436 = scmp.eq.s32.totalorder %s26, 0
      %p437 = por %p435, %p436
      %p438 = scmp.ne.s32.totalorder %s430, %s432
      %p439 = scmp.eq.s32.totalorder %s31, 1
      %p440 = por %p438, %p439
      %p441 = scmp.ne.s32.totalorder %s432, %s433
      %p442 = scmp.eq.s32.totalorder %s31, 0
      %p443 = por %p441, %p442
      %p444 = scmp.ne.s32.totalorder %s432, %s433
      %p445 = scmp.eq.s32.totalorder %s32, 1
      %p446 = por %p444, %p445
      %p448 = scmp.ne.s32.totalorder %s433, %s447
      %p449 = scmp.eq.s32.totalorder %s32, 0
      %p450 = por %p448, %p449
      %p451 = scmp.le.s32.totalorder 1, %s26
      %p452 = scmp.lt.s32.totalorder %s26, 3
      %p453 = pnand %p451, %p452
      %p454 = pneg %p453
      // Predicated region
      $region9: #{tpu_custom_call.1} parent=5 // pred_check
        _
      $region10: #{tpu_custom_call.1} parent=5 // pred_check_branch
        %456 = sbr.rel (%p453) target = $region12
      $region11: #{tpu_custom_call.1} parent=5 // pred_region
        %s457 = ssub.s32 %s26, 1
        // Predicated region
        $region13: #{tpu_custom_call.1} parent=11 // pred_check
          %p458 = pneg %p47
        $region14: #{tpu_custom_call.1} parent=11 // pred_check_branch
          %460 = sbr.rel (%p458) target = $region16
        $region15: #{tpu_custom_call.1} parent=11 // pred_region
          %s462 = ssub.s32 512, 512
          %463 = vsyncadd [#allocation4], %s462
          %s464 = sshll.u32 [#allocation3], 4
          %s465 = int_to_ptr.vmem [resolvable:$true] %s464
          %470 = dma.hbm_to_vmem [thread:$0]  %s0, 512, %s465, [#allocation4], 128, 128, 8
        $region16: #{tpu_custom_call.1} parent=11 // pred_fallthru
          _
        // Predicated region
        $region17: #{tpu_custom_call.1} parent=11 // pred_check
          %p471 = pneg %p68
        $region18: #{tpu_custom_call.1} parent=11 // pred_check_branch
          %473 = sbr.rel (%p471) target = $region20
        $region19: #{tpu_custom_call.1} parent=11 // pred_region
          %s475 = ssub.s32 16, 16
          %476 = vsyncadd [#allocation7], %s475
          %s478 = sshll.u32 [#allocation6], 4
          %s479 = int_to_ptr.vmem [resolvable:$true] %s478
          %481 = dma.hbm_to_vmem [thread:$0]  %s1, 16, %s479, [#allocation7]
        $region20: #{tpu_custom_call.1} parent=11 // pred_fallthru
          _
        // Predicated region
        $region21: #{tpu_custom_call.1} parent=11 // pred_check
          %p482 = pneg %p89
        $region22: #{tpu_custom_call.1} parent=11 // pred_check_branch
          %484 = sbr.rel (%p482) target = $region24
        $region23: #{tpu_custom_call.1} parent=11 // pred_region
          %s486 = ssub.s32 16, 16
          %487 = vsyncadd [#allocation7], %s486
          %s489 = sshll.u32 [#allocation8], 4
          %s490 = int_to_ptr.vmem [resolvable:$true] %s489
          %492 = dma.hbm_to_vmem [thread:$0]  %s2, 16, %s490, [#allocation7]
        $region24: #{tpu_custom_call.1} parent=11 // pred_fallthru
          _
        // Predicated region
        $region25: #{tpu_custom_call.1} parent=11 // pred_check
          %p493 = pneg %p110
        $region26: #{tpu_custom_call.1} parent=11 // pred_check_branch
          %495 = sbr.rel (%p493) target = $region28
        $region27: #{tpu_custom_call.1} parent=11 // pred_region
          %s497 = ssub.s32 16, 16
          %498 = vsyncadd [#allocation10], %s497
          %s500 = sshll.u32 [#allocation9], 4
          %s501 = int_to_ptr.vmem [resolvable:$true] %s500
          %503 = dma.hbm_to_vmem [thread:$0]  %s3, 16, %s501, [#allocation10]
        $region28: #{tpu_custom_call.1} parent=11 // pred_fallthru
          _
      $region12: #{tpu_custom_call.1} parent=5 // pred_fallthru
        _
      %p504 = scmp.lt.s32.totalorder %s26, 2
      // Predicated region
      $region29: #{tpu_custom_call.1} parent=5 // pred_check
        %p505 = pneg %p504
      $region30: #{tpu_custom_call.1} parent=5 // pred_check_branch
        %507 = sbr.rel (%p505) target = $region32
      $region31: #{tpu_custom_call.1} parent=5 // pred_region
        // Predicated region
        $region33: #{tpu_custom_call.1} parent=31 // pred_check
          %p508 = pneg %p130
        $region34: #{tpu_custom_call.1} parent=31 // pred_check_branch
          %510 = sbr.rel (%p508) target = $region36
        $region35: #{tpu_custom_call.1} parent=31 // pred_region
          %p511 = scmp.lt.s32.totalorder %s26, 1
          %s512 = scalar_select %p511, %s26, 1
          %s513 = smul.addr %s512, 16
          %s514 = smul.addr %s513, 4
          %s515 = scalar_lea.vmem %s4, %s514
        $region36: #{tpu_custom_call.1} parent=31 // pred_fallthru
          _
        // Predicated region
        $region37: #{tpu_custom_call.1} parent=31 // pred_check
          %p516 = pneg %p156
        $region38: #{tpu_custom_call.1} parent=31 // pred_check_branch
          %518 = sbr.rel (%p516) target = $region40
        $region39: #{tpu_custom_call.1} parent=31 // pred_region
          %p519 = scmp.lt.s32.totalorder %s26, 1
          %s520 = scalar_select %p519, %s26, 1
          %s521 = smul.addr %s520, 2
          %s522 = scalar_lea.vmem %s5, %s521
        $region40: #{tpu_custom_call.1} parent=31 // pred_fallthru
          _
        // Predicated region
        $region41: #{tpu_custom_call.1} parent=31 // pred_check
          %p523 = pneg %p182
        $region42: #{tpu_custom_call.1} parent=31 // pred_check_branch
          %525 = sbr.rel (%p523) target = $region44
        $region43: #{tpu_custom_call.1} parent=31 // pred_region
          %p526 = scmp.lt.s32.totalorder %s26, 1
          %s527 = scalar_select %p526, %s26, 1
          %s528 = smul.addr %s527, 8
          %s529 = smul.addr %s528, 4
          %s530 = scalar_lea.vmem %s6, %s529
        $region44: #{tpu_custom_call.1} parent=31 // pred_fallthru
          _
        // Predicated region
        $region45: #{tpu_custom_call.1} parent=31 // pred_check
          %p531 = pneg %p208
        $region46: #{tpu_custom_call.1} parent=31 // pred_check_branch
          %533 = sbr.rel (%p531) target = $region48
        $region47: #{tpu_custom_call.1} parent=31 // pred_region
          %p534 = scmp.lt.s32.totalorder %s26, 1
          %s535 = scalar_select %p534, %s26, 1
          %s536 = scalar_lea.vmem %s7, %s535
        $region48: #{tpu_custom_call.1} parent=31 // pred_fallthru
          _
        // Predicated region
        $region49: #{tpu_custom_call.1} parent=31 // pred_check
          %p537 = pneg %p234
        $region50: #{tpu_custom_call.1} parent=31 // pred_check_branch
          %539 = sbr.rel (%p537) target = $region52
        $region51: #{tpu_custom_call.1} parent=31 // pred_region
          %p540 = scmp.lt.s32.totalorder %s26, 1
          %s541 = scalar_select %p540, %s26, 1
          %s542 = scalar_lea.vmem %s8, %s541
        $region52: #{tpu_custom_call.1} parent=31 // pred_fallthru
          _
        // Predicated region
        $region53: #{tpu_custom_call.1} parent=31 // pred_check
          %p543 = pneg %p260
        $region54: #{tpu_custom_call.1} parent=31 // pred_check_branch
          %545 = sbr.rel (%p543) target = $region56
        $region55: #{tpu_custom_call.1} parent=31 // pred_region
          %p546 = scmp.lt.s32.totalorder %s26, 1
          %s547 = scalar_select %p546, %s26, 1
          %s548 = scalar_lea.vmem %s9, %s547
        $region56: #{tpu_custom_call.1} parent=31 // pred_fallthru
          _
        // Predicated region
        $region57: #{tpu_custom_call.1} parent=31 // pred_check
          %p549 = pneg %p286
        $region58: #{tpu_custom_call.1} parent=31 // pred_check_branch
          %551 = sbr.rel (%p549) target = $region60
        $region59: #{tpu_custom_call.1} parent=31 // pred_region
          %s552 = sand.u32 %s26, 1
          %s553 = scalar_lea.sflag [#allocation4], %s552
          %s554 = sand.u32 %s276, 1
          %s555 = smul.addr %s554, 32
          %s556 = scalar_lea.vmem [#allocation11], %s555
          %s558 = ssub.s32 512, 512
          %559 = vsyncadd %s553, %s558
          %s560 = smul.addr %s26, 8
          %s561 = smul.addr %s560, 64
          %s562 = scalar_lea.hbm %s10, %s561
          %s563 = sshll.u32 %s556, 4
          %s564 = int_to_ptr.vmem [resolvable:$true] %s563
          %569 = dma.hbm_to_vmem [thread:$0]  %s562, 512, %s564, %s553, 64, 64, 4
        $region60: #{tpu_custom_call.1} parent=31 // pred_fallthru
          _
        // Predicated region
        $region61: #{tpu_custom_call.1} parent=31 // pred_check
          %p570 = pneg %p312
        $region62: #{tpu_custom_call.1} parent=31 // pred_check_branch
          %572 = sbr.rel (%p570) target = $region64
        $region63: #{tpu_custom_call.1} parent=31 // pred_region
          %p573 = scmp.lt.s32.totalorder %s26, 1
          %s574 = scalar_select %p573, %s26, 1
          %s575 = scalar_lea.vmem %s11, %s574
        $region64: #{tpu_custom_call.1} parent=31 // pred_fallthru
          _
        // Predicated region
        $region65: #{tpu_custom_call.1} parent=31 // pred_check
          %p576 = pneg %p338
        $region66: #{tpu_custom_call.1} parent=31 // pred_check_branch
          %578 = sbr.rel (%p576) target = $region68
        $region67: #{tpu_custom_call.1} parent=31 // pred_region
          %p579 = scmp.lt.s32.totalorder %s26, 1
          %s580 = scalar_select %p579, %s26, 1
          %s581 = smul.addr %s580, 16
          %s582 = smul.addr %s581, 4
          %s583 = scalar_lea.vmem %s12, %s582
        $region68: #{tpu_custom_call.1} parent=31 // pred_fallthru
          _
        // Predicated region
        $region69: #{tpu_custom_call.1} parent=31 // pred_check
          %p584 = pneg %p364
        $region70: #{tpu_custom_call.1} parent=31 // pred_check_branch
          %586 = sbr.rel (%p584) target = $region72
        $region71: #{tpu_custom_call.1} parent=31 // pred_region
          %p587 = scmp.lt.s32.totalorder %s26, 1
          %s588 = scalar_select %p587, %s26, 1
          %s589 = scalar_lea.vmem %s13, %s588
        $region72: #{tpu_custom_call.1} parent=31 // pred_fallthru
          _
        // Predicated region
        $region73: #{tpu_custom_call.1} parent=31 // pred_check
          %p590 = pneg %p390
        $region74: #{tpu_custom_call.1} parent=31 // pred_check_branch
          %592 = sbr.rel (%p590) target = $region76
        $region75: #{tpu_custom_call.1} parent=31 // pred_region
          %p593 = scmp.lt.s32.totalorder %s26, 1
          %s594 = scalar_select %p593, %s26, 1
          %s595 = scalar_lea.vmem %s14, %s594
        $region76: #{tpu_custom_call.1} parent=31 // pred_fallthru
          _
        // Predicated region
        $region77: #{tpu_custom_call.1} parent=31 // pred_check
          %p596 = pneg %p416
        $region78: #{tpu_custom_call.1} parent=31 // pred_check_branch
          %598 = sbr.rel (%p596) target = $region80
        $region79: #{tpu_custom_call.1} parent=31 // pred_region
          %p599 = scmp.lt.s32.totalorder %s26, 1
          %s600 = scalar_select %p599, %s26, 1
          %s601 = scalar_lea.vmem %s15, %s600
        $region80: #{tpu_custom_call.1} parent=31 // pred_fallthru
          _
      $region32: #{tpu_custom_call.1} parent=5 // pred_fallthru
        _
      %p602 = scmp.le.s32.totalorder 1, %s26
      %p603 = scmp.lt.s32.totalorder %s26, 3
      %p604 = pnand %p602, %p603
      %p605 = pneg %p604
      // Predicated region
      $region81: #{tpu_custom_call.1} parent=5 // pred_check
        _
      $region82: #{tpu_custom_call.1} parent=5 // pred_check_branch
        %607 = sbr.rel (%p604) target = $region84
      $region83: #{tpu_custom_call.1} parent=5 // pred_region
        %s608 = ssub.s32 %s26, 1
        // Predicated region
        $region85: #{tpu_custom_call.1} parent=83 // pred_check
          %p609 = pneg %p47
        $region86: #{tpu_custom_call.1} parent=83 // pred_check_branch
          %611 = sbr.rel (%p609) target = $region88
        $region87: #{tpu_custom_call.1} parent=83 // pred_region
          %612 = dma.done [#allocation4], 512
        $region88: #{tpu_custom_call.1} parent=83 // pred_fallthru
          _
        // Predicated region
        $region89: #{tpu_custom_call.1} parent=83 // pred_check
          %p613 = pneg %p68
        $region90: #{tpu_custom_call.1} parent=83 // pred_check_branch
          %615 = sbr.rel (%p613) target = $region92
        $region91: #{tpu_custom_call.1} parent=83 // pred_region
          %616 = dma.done [#allocation7], 16
        $region92: #{tpu_custom_call.1} parent=83 // pred_fallthru
          _
        // Predicated region
        $region93: #{tpu_custom_call.1} parent=83 // pred_check
          %p617 = pneg %p89
        $region94: #{tpu_custom_call.1} parent=83 // pred_check_branch
          %619 = sbr.rel (%p617) target = $region96
        $region95: #{tpu_custom_call.1} parent=83 // pred_region
          %620 = dma.done [#allocation7], 16
        $region96: #{tpu_custom_call.1} parent=83 // pred_fallthru
          _
        // Predicated region
        $region97: #{tpu_custom_call.1} parent=83 // pred_check
          %p621 = pneg %p110
        $region98: #{tpu_custom_call.1} parent=83 // pred_check_branch
          %623 = sbr.rel (%p621) target = $region100
        $region99: #{tpu_custom_call.1} parent=83 // pred_region
          %624 = dma.done [#allocation10], 16
        $region100: #{tpu_custom_call.1} parent=83 // pred_fallthru
          _
        %s625 = sand.u32 %s31, 1
        %s626 = scalar_lea.sflag [#allocation4], %s625
        %s627 = sand.u32 %s279, 1
        %s628 = smul.addr %s627, 32
        %s629 = scalar_lea.vmem [#allocation11], %s628
        // Predicated region
        $region101: #{tpu_custom_call.1} parent=83 // pred_check
          %p630 = pneg %p292
        $region102: #{tpu_custom_call.1} parent=83 // pred_check_branch
          %632 = sbr.rel (%p630) target = $region104
        $region103: #{tpu_custom_call.1} parent=83 // pred_region
          %633 = dma.done %s626, 512
        $region104: #{tpu_custom_call.1} parent=83 // pred_fallthru
          _
        %p634 = pneg %p47
        %p635 = pneg %p44
        %p636 = pneg %p68
        %p637 = pneg %p65
        %p638 = pneg %p89
        %p639 = pneg %p86
        %p640 = pneg %p110
        %p641 = pneg %p107
        %p642 = scmp.lt.s32.totalorder %s31, 1
        %s643 = scalar_select %p642, %s31, 1
        %s644 = smul.addr %s643, 16
        %s645 = smul.addr %s644, 4
        %s646 = scalar_lea.vmem %s4, %s645
        %p647 = pneg %p136
        %p648 = pneg %p133
        %p649 = scmp.lt.s32.totalorder %s31, 1
        %s650 = scalar_select %p649, %s31, 1
        %s651 = smul.addr %s650, 2
        %s652 = scalar_lea.vmem %s5, %s651
        %p653 = pneg %p162
        %p654 = pneg %p159
        %p655 = scmp.lt.s32.totalorder %s31, 1
        %s656 = scalar_select %p655, %s31, 1
        %s657 = smul.addr %s656, 8
        %s658 = smul.addr %s657, 4
        %s659 = scalar_lea.vmem %s6, %s658
        %p660 = pneg %p188
        %p661 = pneg %p185
        %p662 = scmp.lt.s32.totalorder %s31, 1
        %s663 = scalar_select %p662, %s31, 1
        %s664 = scalar_lea.vmem %s7, %s663
        %p665 = pneg %p214
        %p666 = pneg %p211
        %p667 = scmp.lt.s32.totalorder %s31, 1
        %s668 = scalar_select %p667, %s31, 1
        %s669 = scalar_lea.vmem %s8, %s668
        %p670 = pneg %p240
        %p671 = pneg %p237
        %p672 = scmp.lt.s32.totalorder %s31, 1
        %s673 = scalar_select %p672, %s31, 1
        %s674 = scalar_lea.vmem %s9, %s673
        %p675 = pneg %p266
        %p676 = pneg %p263
        %s677 = sand.u32 %s31, 1
        %s678 = scalar_lea.sflag [#allocation4], %s677
        %s679 = sand.u32 %s279, 1
        %s680 = smul.addr %s679, 32
        %s681 = scalar_lea.vmem [#allocation11], %s680
        %p682 = pneg %p292
        %p683 = pneg %p289
        %p684 = scmp.lt.s32.totalorder %s31, 1
        %s685 = scalar_select %p684, %s31, 1
        %s686 = scalar_lea.vmem %s11, %s685
        %p687 = pneg %p318
        %p688 = pneg %p315
        %p689 = scmp.lt.s32.totalorder %s31, 1
        %s690 = scalar_select %p689, %s31, 1
        %s691 = smul.addr %s690, 16
        %s692 = smul.addr %s691, 4
        %s693 = scalar_lea.vmem %s12, %s692
        %p694 = pneg %p344
        %p695 = pneg %p341
        %p696 = scmp.lt.s32.totalorder %s31, 1
        %s697 = scalar_select %p696, %s31, 1
        %s698 = scalar_lea.vmem %s13, %s697
        %p699 = pneg %p370
        %p700 = pneg %p367
        %p701 = scmp.lt.s32.totalorder %s31, 1
        %s702 = scalar_select %p701, %s31, 1
        %s703 = scalar_lea.vmem %s14, %s702
        %p704 = pneg %p396
        %p705 = pneg %p393
        %p706 = scmp.lt.s32.totalorder %s31, 1
        %s707 = scalar_select %p706, %s31, 1
        %s708 = scalar_lea.vmem %s15, %s707
        %p709 = pneg %p422
        %p710 = pneg %p419
        %p711 = pneg %p443
        %p712 = pneg %p440
        %p713 = scmp.lt.s32.totalorder %s31, 1
        %s714 = scalar_select %p713, %s31, 1
        %s715 = smul.addr %s714, 16
        %s716 = smul.addr %s715, 4
        %s717 = scalar_lea.vmem %s4, %s716
        %p718 = scmp.lt.s32.totalorder %s31, 1
        %s719 = scalar_select %p718, %s31, 1
        %s720 = smul.addr %s719, 2
        %s721 = scalar_lea.vmem %s5, %s720
        %p722 = scmp.lt.s32.totalorder %s31, 1
        %s723 = scalar_select %p722, %s31, 1
        %s724 = smul.addr %s723, 8
        %s725 = smul.addr %s724, 4
        %s726 = scalar_lea.vmem %s6, %s725
        %p727 = scmp.lt.s32.totalorder %s31, 1
        %s728 = scalar_select %p727, %s31, 1
        %s729 = scalar_lea.vmem %s7, %s728
        %p730 = scmp.lt.s32.totalorder %s31, 1
        %s731 = scalar_select %p730, %s31, 1
        %s732 = scalar_lea.vmem %s8, %s731
        %p733 = scmp.lt.s32.totalorder %s31, 1
        %s734 = scalar_select %p733, %s31, 1
        %s735 = scalar_lea.vmem %s9, %s734
        %p736 = scmp.lt.s32.totalorder %s31, 1
        %s737 = scalar_select %p736, %s31, 1
        %s738 = scalar_lea.vmem %s11, %s737
        %p739 = scmp.lt.s32.totalorder %s31, 1
        %s740 = scalar_select %p739, %s31, 1
        %s741 = smul.addr %s740, 16
        %s742 = smul.addr %s741, 4
        %s743 = scalar_lea.vmem %s12, %s742
        %p744 = scmp.lt.s32.totalorder %s31, 1
        %s745 = scalar_select %p744, %s31, 1
        %s746 = scalar_lea.vmem %s13, %s745
        %p747 = scmp.lt.s32.totalorder %s31, 1
        %s748 = scalar_select %p747, %s31, 1
        %s749 = scalar_lea.vmem %s14, %s748
        %p750 = scmp.lt.s32.totalorder %s31, 1
        %s751 = scalar_select %p750, %s31, 1
        %s752 = scalar_lea.vmem %s15, %s751
        %p754 = scmp.eq.s32.totalorder %s31, 0
        // Predicated region
        $region105: #{tpu_custom_call.1} parent=83 // pred_check
          %p755 = pneg %p754
        $region106: #{tpu_custom_call.1} parent=83 // pred_check_branch
          %757 = sbr.rel (%p755) target = $region108
        $region107: #{tpu_custom_call.1} parent=83 // pred_region
          %v758 = vld [vmem:[#allocation3] sm:$0xff]
          %v759 = vld [vmem:[#allocation3 + $0x8] sm:$0xff]
          %v760 = vld [vmem:[#allocation3 + $0x10] sm:$0xff]
          %v761 = vld [vmem:[#allocation3 + $0x18] sm:$0xff]
          %v762 = vld [vmem:[#allocation8] sm:$0x1]
          %v763 = vld [vmem:[#allocation9] sm:$0x1]
          %vm764 = vcmask 523264
          %v765 = vsel %vm764, %v758, 0.0
          %766 = vadd.xlane.f32.xlu0 %v765
          %v767 = vpop.xlane.xlu0 %766
          %v768 = vsel %vm764, %v759, 0.0
          %769 = vadd.xlane.f32.xlu0 %v768
          %v770 = vpop.xlane.xlu0 %769
          %v771 = vsel %vm764, %v760, 0.0
          %772 = vadd.xlane.f32.xlu0 %v771
          %v773 = vpop.xlane.xlu0 %772
          %v774 = vsel %vm764, %v761, 0.0
          %775 = vadd.xlane.f32.xlu0 %v774
          %v776 = vpop.xlane.xlu0 %775
          %v777 = vrcp.pop 64.0
          %v778 = vmul.f32 %v767, %v777
          %v779 = vmul.f32 %v770, %v777
          %v780 = vmul.f32 %v773, %v777
          %v781 = vmul.f32 %v776, %v777
          %v782 = vsub.f32 %v758, %v778
          %v783 = vsub.f32 %v759, %v779
          %v784 = vsub.f32 %v760, %v780
          %v785 = vsub.f32 %v761, %v781
          %v786 = vmul.f32 %v782, %v782
          %v787 = vmul.f32 %v783, %v783
          %v788 = vmul.f32 %v784, %v784
          %v789 = vmul.f32 %v785, %v785
          %v790 = vsel %vm764, %v786, 0.0
          %791 = vadd.xlane.f32.xlu0 %v790
          %v792 = vpop.xlane.xlu0 %791
          %v793 = vsel %vm764, %v787, 0.0
          %794 = vadd.xlane.f32.xlu0 %v793
          %v795 = vpop.xlane.xlu0 %794
          %v796 = vsel %vm764, %v788, 0.0
          %797 = vadd.xlane.f32.xlu0 %v796
          %v798 = vpop.xlane.xlu0 %797
          %v799 = vsel %vm764, %v789, 0.0
          %800 = vadd.xlane.f32.xlu0 %v799
          %v801 = vpop.xlane.xlu0 %800
          %v802 = vmul.f32 %v792, %v777
          %v803 = vmul.f32 %v795, %v777
          %v804 = vmul.f32 %v798, %v777
          %v805 = vmul.f32 %v801, %v777
          %v806 = vadd.f32 %v802, 1e-12
          %v807 = vadd.f32 %v803, 1e-12
          %v808 = vadd.f32 %v804, 1e-12
          %v809 = vadd.f32 %v805, 1e-12
          %v810 = vrsqrt.pop %v806
          %v811 = vrsqrt.pop %v807
          %v812 = vrsqrt.pop %v808
          %v813 = vrsqrt.pop %v809
          %v814 = vmul.f32 %v782, %v810
          %v815 = vmul.f32 %v783, %v811
          %v816 = vmul.f32 %v784, %v812
          %v817 = vmul.f32 %v785, %v813
          %v819 = vlaneseq
          %v820 = vshrl.u32 %v819, 7
          %v821 = vsub.s32 0, %v820
          %v822 = vrot.slane %v762, %v821
          %v824 = vmul.f32 %v814, %v822
          %v825 = vmul.f32 %v815, %v822
          %v826 = vmul.f32 %v816, %v822
          %v827 = vmul.f32 %v817, %v822
          %v829 = vlaneseq
          %v830 = vshrl.u32 %v829, 7
          %v831 = vsub.s32 0, %v830
          %v832 = vrot.slane %v763, %v831
          %v834 = vadd.f32 %v824, %v832
          %v835 = vadd.f32 %v825, %v832
          %v836 = vadd.f32 %v826, %v832
          %v837 = vadd.f32 %v827, %v832
          %838 = vst.msk [vmem:[#allocation2] sm:$0xff] %vm764, %v834
          %839 = vst.msk [vmem:[#allocation2 + $0x8] sm:$0xff] %vm764, %v835
          %840 = vst.msk [vmem:[#allocation2 + $0x10] sm:$0xff] %vm764, %v836
          %841 = vst.msk [vmem:[#allocation2 + $0x18] sm:$0xff] %vm764, %v837
        $region108: #{tpu_custom_call.1} parent=83 // pred_fallthru
          _
        %v842 = vld [vmem:[#allocation2] sm:$0xff]
        %v843 = vld [vmem:[#allocation2 + $0x8] sm:$0xff]
        %v844 = vld [vmem:[#allocation2 + $0x10] sm:$0xff]
        %v845 = vld [vmem:[#allocation2 + $0x18] sm:$0xff]
        %v846 = vpack.c.bf16 %v843, %v842
        %v847 = vpack.c.bf16 %v845, %v844
        %v848 = vld [vmem:[%s717] sm:$0xff]
        %v849 = vld [vmem:[%s717 + $0x8] sm:$0xff]
        %v850 = vld [vmem:[%s717 + $0x10] sm:$0xff]
        %v851 = vld [vmem:[%s717 + $0x18] sm:$0xff]
        %v852 = vld [vmem:[%s717 + $0x20] sm:$0xff]
        %v853 = vld [vmem:[%s717 + $0x28] sm:$0xff]
        %v854 = vld [vmem:[%s717 + $0x30] sm:$0xff]
        %v855 = vld [vmem:[%s717 + $0x38] sm:$0xff]
        %v856 = vld [vmem:[%s721] sm:$0x3]
        %v858 = vlaneseq
        %v859 = vshrl.u32 %v858, 7
        %v860 = vsub.s32 0, %v859
        %v861 = vrot.slane %v856, %v860
        %v862 = vlaneseq
        %v863 = vshrl.u32 %v862, 7
        %v864 = vsub.s32 1, %v863
        %v865 = vrot.slane %v856, %v864
        %v876 = vunpack.c.l.b16 %v848
        %v877 = vunpack.c.h.b16 %v848
        %v878 = vunpack.c.l.b16 %v849
        %v879 = vunpack.c.h.b16 %v849
        %v880 = vunpack.c.l.b16 %v850
        %v881 = vunpack.c.h.b16 %v850
        %v882 = vunpack.c.l.b16 %v851
        %v883 = vunpack.c.h.b16 %v851
        %v884 = vunpack.c.l.b16 %v852
        %v885 = vunpack.c.h.b16 %v852
        %v886 = vunpack.c.l.b16 %v853
        %v887 = vunpack.c.h.b16 %v853
        %v888 = vunpack.c.l.b16 %v854
        %v889 = vunpack.c.h.b16 %v854
        %v890 = vunpack.c.l.b16 %v855
        %v891 = vunpack.c.h.b16 %v855
        %v892 = vpack.c.b16 %v878, %v876
        %v893 = vpack.c.b16 %v879, %v877
        %v894 = vpack.c.b16 %v882, %v880
        %v895 = vpack.c.b16 %v883, %v881
        %v896 = vpack.c.b16 %v886, %v884
        %v897 = vpack.c.b16 %v887, %v885
        %v898 = vpack.c.b16 %v890, %v888
        %v899 = vpack.c.b16 %v891, %v889
        %vm908 = vcmask 523264
        %v910 = vsel %vm908, %v846, 0
        %v913 = vsel %vm908, %v847, 0
        %915 = vmatprep.subr.bf16.mxu0 %v893
        %916 = vmatpush1.bf16.msra.mxu0 %v892
        %917 = vmatprep.subr.bf16.mxu0 %v895
        %918 = vmatpush1.bf16.msra.mxu0 %v894
        %919 = vmatprep.subr.bf16.mxu0 %v897
        %920 = vmatpush1.bf16.msra.mxu0 %v896
        %921 = vmatprep.subr.bf16.mxu0 %v899
        %922 = vmatpush1.bf16.msra.mxu0 %v898
        %923 = vmatprep.subr.bf16.mxu0 0
        %924 = vmatpush1.bf16.msra.mxu0 0
        %925 = vmatprep.subr.bf16.mxu0 0
        %926 = vmatpush1.bf16.msra.mxu0 0
        %927 = vmatprep.subr.bf16.mxu0 0
        %928 = vmatpush1.bf16.msra.mxu0 0
        %929 = vmatprep.subr.bf16.mxu0 0
        %930 = vmatpush1.bf16.msra.mxu0 0
        %931 = vmatprep.subr.bf16.mxu0 0
        %932 = vmatpush1.bf16.msra.mxu0 0
        %933 = vmatprep.subr.bf16.mxu0 0
        %934 = vmatpush1.bf16.msra.mxu0 0
        %935 = vmatprep.subr.bf16.mxu0 0
        %936 = vmatpush1.bf16.msra.mxu0 0
        %937 = vmatprep.subr.bf16.mxu0 0
        %938 = vmatpush1.bf16.msra.mxu0 0
        %939 = vmatprep.subr.bf16.mxu0 0
        %940 = vmatpush1.bf16.msra.mxu0 0
        %941 = vmatprep.subr.bf16.mxu0 0
        %942 = vmatpush1.bf16.msra.mxu0 0
        %943 = vmatprep.subr.bf16.mxu0 0
        %944 = vmatpush1.bf16.msra.mxu0 0
        %945 = vmatprep.subr.bf16.mxu0 0
        %946 = vmatpush1.bf16.msra.mxu0 0
        %947 = vmatprep.mubr.bf16.mxu0 0
        %948 = vmatmul.mubr.bf16.gmra.mrb[0].mxu0 %v910
        %v949 = vpop.f32.mrb[0].mxu0
        %v950 = vadd.f32 %v861, %v949
        %v951 = vpop.f32.mrb[0].mxu0
        %v952 = vadd.f32 %v865, %v951
        %v953 = vpop.f32.mrb[0].mxu0
        %v954 = vadd.f32 %v861, %v953
        %v955 = vpop.f32.mrb[0].mxu0
        %v956 = vadd.f32 %v865, %v955
        %957 = vmatprep.mubr.bf16.mxu0 0
        %958 = vmatmul.mubr.bf16.gmra.mrb[0].mxu0 %v913
        %v959 = vpop.f32.mrb[0].mxu0
        %v960 = vadd.f32 %v861, %v959
        %v961 = vpop.f32.mrb[0].mxu0
        %v962 = vadd.f32 %v865, %v961
        %v963 = vpop.f32.mrb[0].mxu0
        %v964 = vadd.f32 %v861, %v963
        %v965 = vpop.f32.mrb[0].mxu0
        %v966 = vadd.f32 %v865, %v965
        %967 = vdwg.mxu0
        %v968 = vld [vmem:[#allocation6] sm:$0x1]
        %v969 = vpack.c.bf16 %v954, %v950
        %v970 = vpack.c.bf16 %v964, %v960
        %v971 = vpack.c.bf16 %v956, %v952
        %v972 = vpack.c.bf16 %v966, %v962
        %975 = vrot.lane.b32.xlu0 %v969, 64
        %v976 = vpop.permute.xlu0 %975
        %977 = vrot.lane.b32.xlu0 %v970, 64
        %v978 = vpop.permute.xlu0 %977
        %vm979 = vcmask 130048
        %v981 = vsel %vm979, %v969, 0
        %v984 = vsel %vm979, %v970, 0
        %v987 = vsel %vm979, %v976, 0
        %v990 = vsel %vm979, %v978, 0
        %992 = vmatprep.subr.bf16.mxu0 0
        %993 = vmatpush1.bf16.xpose.msra.mxu0 %v987
        %994 = vmatprep.subr.bf16.mxu0 0
        %995 = vmatpush1.bf16.xpose.msra.mxu0 %v990
        %996 = vmatprep.subr.bf16.mxu0 0
        %997 = vmatpush1.bf16.xpose.msra.mxu0 0
        %998 = vmatprep.subr.bf16.mxu0 0
        %999 = vmatpush1.bf16.xpose.msra.mxu0 0
        %1000 = vmatprep.subr.bf16.mxu0 0
        %1001 = vmatpush1.bf16.xpose.msra.mxu0 0
        %1002 = vmatprep.subr.bf16.mxu0 0
        %1003 = vmatpush1.bf16.xpose.msra.mxu0 0
        %1004 = vmatprep.subr.bf16.mxu0 0
        %1005 = vmatpush1.bf16.xpose.msra.mxu0 0
        %1006 = vmatprep.subr.bf16.mxu0 0
        %1007 = vmatpush1.bf16.xpose.msra.mxu0 0
        %1008 = vmatprep.subr.bf16.mxu0 0
        %1009 = vmatpush1.bf16.xpose.msra.mxu0 0
        %1010 = vmatprep.subr.bf16.mxu0 0
        %1011 = vmatpush1.bf16.xpose.msra.mxu0 0
        %1012 = vmatprep.subr.bf16.mxu0 0
        %1013 = vmatpush1.bf16.xpose.msra.mxu0 0
        %1014 = vmatprep.subr.bf16.mxu0 0
        %1015 = vmatpush1.bf16.xpose.msra.mxu0 0
        %1016 = vmatprep.subr.bf16.mxu0 0
        %1017 = vmatpush1.bf16.xpose.msra.mxu0 0
        %1018 = vmatprep.subr.bf16.mxu0 0
        %1019 = vmatpush1.bf16.xpose.msra.mxu0 0
        %1020 = vmatprep.subr.bf16.mxu0 0
        %1021 = vmatpush1.bf16.xpose.msra.mxu0 0
        %1022 = vmatprep.subr.bf16.mxu0 0
        %1023 = vmatpush1.bf16.xpose.msra.mxu0 0
        %1024 = vmatprep.mubr.bf16.mxu0 0
        %1025 = vmatmul.mubr.bf16.gmra.mrb[0].mxu0 %v981
        %v1026 = vpop.f32.mrb[0].mxu0
        %v1027 = vadd.f32 0.0, %v1026
        %v1028 = vpop.f32.mrb[0].mxu0
        %v1029 = vpop.f32.mrb[0].mxu0
        %v1030 = vadd.f32 0.0, %v1029
        %v1031 = vpop.f32.mrb[0].mxu0
        %1032 = vmatprep.mubr.bf16.mxu0 0
        %1033 = vmatmul.mubr.bf16.gmra.mrb[0].mxu0 %v984
        %v1034 = vpop.f32.mrb[0].mxu0
        %v1035 = vadd.f32 0.0, %v1034
        %v1036 = vpop.f32.mrb[0].mxu0
        %v1037 = vpop.f32.mrb[0].mxu0
        %v1038 = vadd.f32 0.0, %v1037
        %v1039 = vpop.f32.mrb[0].mxu0
        %1040 = vdwg.mxu0
        %v1041 = vmul.f32 %v1027, 0.25
        %v1042 = vmul.f32 %v1030, 0.25
        %v1043 = vmul.f32 %v1035, 0.25
        %v1044 = vmul.f32 %v1038, 0.25
        %v1046 = vlaneseq
        %v1047 = vshrl.u32 %v1046, 7
        %v1048 = vsub.s32 0, %v1047
        %v1049 = vrot.slane %v968, %v1048
        %v1051 = vadd.f32 %v1041, %v1049
        %v1052 = vadd.f32 %v1042, %v1049
        %v1053 = vadd.f32 %v1043, %v1049
        %v1054 = vadd.f32 %v1044, %v1049
        %vm1055 = vcmask 261120
        %v1056 = vsel %vm1055, %v1051, -inf
        %1057 = vmax.xlane.f32.xlu0 %v1056
        %v1058 = vpop.xlane.xlu0 %1057
        %v1059 = vsel %vm1055, %v1052, -inf
        %1060 = vmax.xlane.f32.xlu0 %v1059
        %v1061 = vpop.xlane.xlu0 %1060
        %v1062 = vsel %vm1055, %v1053, -inf
        %1063 = vmax.xlane.f32.xlu0 %v1062
        %v1064 = vpop.xlane.xlu0 %1063
        %v1065 = vsel %vm1055, %v1054, -inf
        %1066 = vmax.xlane.f32.xlu0 %v1065
        %v1067 = vpop.xlane.xlu0 %1066
        %v1068 = vsub.f32 %v1051, %v1058
        %v1069 = vsub.f32 %v1052, %v1061
        %v1070 = vsub.f32 %v1053, %v1064
        %v1071 = vsub.f32 %v1054, %v1067
        %v1072 = vmul.f32 %v1068, 1.442695
        %v1073 = vpow.pop %v1072
        %v1074 = vmul.f32 %v1069, 1.442695
        %v1075 = vpow.pop %v1074
        %v1076 = vmul.f32 %v1070, 1.442695
        %v1077 = vpow.pop %v1076
        %v1078 = vmul.f32 %v1071, 1.442695
        %v1079 = vpow.pop %v1078
        %v1080 = vsel %vm1055, %v1073, 0.0
        %1081 = vadd.xlane.f32.xlu0 %v1080
        %v1082 = vpop.xlane.xlu0 %1081
        %v1083 = vsel %vm1055, %v1075, 0.0
        %1084 = vadd.xlane.f32.xlu0 %v1083
        %v1085 = vpop.xlane.xlu0 %1084
        %v1086 = vsel %vm1055, %v1077, 0.0
        %1087 = vadd.xlane.f32.xlu0 %v1086
        %v1088 = vpop.xlane.xlu0 %1087
        %v1089 = vsel %vm1055, %v1079, 0.0
        %1090 = vadd.xlane.f32.xlu0 %v1089
        %v1091 = vpop.xlane.xlu0 %1090
        %v1092 = vrcp.pop %v1082
        %v1093 = vrcp.pop %v1085
        %v1094 = vrcp.pop %v1088
        %v1095 = vrcp.pop %v1091
        %v1096 = vmul.f32 %v1073, %v1092
        %v1097 = vmul.f32 %v1075, %v1093
        %v1098 = vmul.f32 %v1077, %v1094
        %v1099 = vmul.f32 %v1079, %v1095
        %v1100 = vpack.c.bf16 %v1097, %v1096
        %v1101 = vpack.c.bf16 %v1099, %v1098
        %v1103 = vsel %vm1055, %v1100, 0
        %v1106 = vsel %vm1055, %v1101, 0
        %1108 = vmatprep.subr.bf16.mxu0 0
        %1109 = vmatpush1.bf16.msra.mxu0 %v971
        %1110 = vmatprep.subr.bf16.mxu0 0
        %1111 = vmatpush1.bf16.msra.mxu0 %v972
        %1112 = vmatprep.subr.bf16.mxu0 0
        %1113 = vmatpush1.bf16.msra.mxu0 0
        %1114 = vmatprep.subr.bf16.mxu0 0
        %1115 = vmatpush1.bf16.msra.mxu0 0
        %1116 = vmatprep.subr.bf16.mxu0 0
        %1117 = vmatpush1.bf16.msra.mxu0 0
        %1118 = vmatprep.subr.bf16.mxu0 0
        %1119 = vmatpush1.bf16.msra.mxu0 0
        %1120 = vmatprep.subr.bf16.mxu0 0
        %1121 = vmatpush1.bf16.msra.mxu0 0
        %1122 = vmatprep.subr.bf16.mxu0 0
        %1123 = vmatpush1.bf16.msra.mxu0 0
        %1124 = vmatprep.subr.bf16.mxu0 0
        %1125 = vmatpush1.bf16.msra.mxu0 0
        %1126 = vmatprep.subr.bf16.mxu0 0
        %1127 = vmatpush1.bf16.msra.mxu0 0
        %1128 = vmatprep.subr.bf16.mxu0 0
        %1129 = vmatpush1.bf16.msra.mxu0 0
        %1130 = vmatprep.subr.bf16.mxu0 0
        %1131 = vmatpush1.bf16.msra.mxu0 0
        %1132 = vmatprep.subr.bf16.mxu0 0
        %1133 = vmatpush1.bf16.msra.mxu0 0
        %1134 = vmatprep.subr.bf16.mxu0 0
        %1135 = vmatpush1.bf16.msra.mxu0 0
        %1136 = vmatprep.subr.bf16.mxu0 0
        %1137 = vmatpush1.bf16.msra.mxu0 0
        %1138 = vmatprep.subr.bf16.mxu0 0
        %1139 = vmatpush1.bf16.msra.mxu0 0
        %1140 = vmatprep.mubr.bf16.mxu0 0
        %1141 = vmatmul.mubr.bf16.gmra.mrb[0].mxu0 %v1103
        %v1142 = vpop.f32.mrb[0].mxu0
        %v1143 = vadd.f32 0.0, %v1142
        %v1144 = vpop.f32.mrb[0].mxu0
        %v1145 = vpop.f32.mrb[0].mxu0
        %v1146 = vadd.f32 0.0, %v1145
        %v1147 = vpop.f32.mrb[0].mxu0
        %1148 = vmatprep.mubr.bf16.mxu0 0
        %1149 = vmatmul.mubr.bf16.gmra.mrb[0].mxu0 %v1106
        %v1150 = vpop.f32.mrb[0].mxu0
        %v1151 = vadd.f32 0.0, %v1150
        %v1152 = vpop.f32.mrb[0].mxu0
        %v1153 = vpop.f32.mrb[0].mxu0
        %v1154 = vadd.f32 0.0, %v1153
        %v1155 = vpop.f32.mrb[0].mxu0
        %1156 = vdwg.mxu0
        %1157 = vrot.lane.b32.xlu0 %v969, 112
        %v1158 = vpop.permute.xlu0 %1157
        %1159 = vrot.lane.b32.xlu0 %v970, 112
        %v1160 = vpop.permute.xlu0 %1159
        %1161 = vrot.lane.b32.xlu0 %v969, 48
        %v1162 = vpop.permute.xlu0 %1161
        %1163 = vrot.lane.b32.xlu0 %v970, 48
        %v1164 = vpop.permute.xlu0 %1163
        %v1166 = vsel %vm979, %v1158, 0
        %v1169 = vsel %vm979, %v1160, 0
        %v1172 = vsel %vm979, %v1162, 0
        %v1175 = vsel %vm979, %v1164, 0
        %1177 = vmatprep.subr.bf16.mxu0 0
        %1178 = vmatpush1.bf16.xpose.msra.mxu0 %v1172
        %1179 = vmatprep.subr.bf16.mxu0 0
        %1180 = vmatpush1.bf16.xpose.msra.mxu0 %v1175
        %1181 = vmatprep.subr.bf16.mxu0 0
        %1182 = vmatpush1.bf16.xpose.msra.mxu0 0
        %1183 = vmatprep.subr.bf16.mxu0 0
        %1184 = vmatpush1.bf16.xpose.msra.mxu0 0
        %1185 = vmatprep.subr.bf16.mxu0 0
        %1186 = vmatpush1.bf16.xpose.msra.mxu0 0
        %1187 = vmatprep.subr.bf16.mxu0 0
        %1188 = vmatpush1.bf16.xpose.msra.mxu0 0
        %1189 = vmatprep.subr.bf16.mxu0 0
        %1190 = vmatpush1.bf16.xpose.msra.mxu0 0
        %1191 = vmatprep.subr.bf16.mxu0 0
        %1192 = vmatpush1.bf16.xpose.msra.mxu0 0
        %1193 = vmatprep.subr.bf16.mxu0 0
        %1194 = vmatpush1.bf16.xpose.msra.mxu0 0
        %1195 = vmatprep.subr.bf16.mxu0 0
        %1196 = vmatpush1.bf16.xpose.msra.mxu0 0
        %1197 = vmatprep.subr.bf16.mxu0 0
        %1198 = vmatpush1.bf16.xpose.msra.mxu0 0
        %1199 = vmatprep.subr.bf16.mxu0 0
        %1200 = vmatpush1.bf16.xpose.msra.mxu0 0
        %1201 = vmatprep.subr.bf16.mxu0 0
        %1202 = vmatpush1.bf16.xpose.msra.mxu0 0
        %1203 = vmatprep.subr.bf16.mxu0 0
        %1204 = vmatpush1.bf16.xpose.msra.mxu0 0
        %1205 = vmatprep.subr.bf16.mxu0 0
        %1206 = vmatpush1.bf16.xpose.msra.mxu0 0
        %1207 = vmatprep.subr.bf16.mxu0 0
        %1208 = vmatpush1.bf16.xpose.msra.mxu0 0
        %1209 = vmatprep.mubr.bf16.mxu0 0
        %1210 = vmatmul.mubr.bf16.gmra.mrb[0].mxu0 %v1166
        %v1211 = vpop.f32.mrb[0].mxu0
        %v1212 = vadd.f32 0.0, %v1211
        %v1213 = vpop.f32.mrb[0].mxu0
        %v1214 = vpop.f32.mrb[0].mxu0
        %v1215 = vadd.f32 0.0, %v1214
        %v1216 = vpop.f32.mrb[0].mxu0
        %1217 = vmatprep.mubr.bf16.mxu0 0
        %1218 = vmatmul.mubr.bf16.gmra.mrb[0].mxu0 %v1169
        %v1219 = vpop.f32.mrb[0].mxu0
        %v1220 = vadd.f32 0.0, %v1219
        %v1221 = vpop.f32.mrb[0].mxu0
        %v1222 = vpop.f32.mrb[0].mxu0
        %v1223 = vadd.f32 0.0, %v1222
        %v1224 = vpop.f32.mrb[0].mxu0
        %1225 = vdwg.mxu0
        %v1226 = vmul.f32 %v1212, 0.25
        %v1227 = vmul.f32 %v1215, 0.25
        %v1228 = vmul.f32 %v1220, 0.25
        %v1229 = vmul.f32 %v1223, 0.25
        %v1230 = vadd.f32 %v1226, %v1049
        %v1231 = vadd.f32 %v1227, %v1049
        %v1232 = vadd.f32 %v1228, %v1049
        %v1233 = vadd.f32 %v1229, %v1049
        %v1234 = vsel %vm1055, %v1230, -inf
        %1235 = vmax.xlane.f32.xlu0 %v1234
        %v1236 = vpop.xlane.xlu0 %1235
        %v1237 = vsel %vm1055, %v1231, -inf
        %1238 = vmax.xlane.f32.xlu0 %v1237
        %v1239 = vpop.xlane.xlu0 %1238
        %v1240 = vsel %vm1055, %v1232, -inf
        %1241 = vmax.xlane.f32.xlu0 %v1240
        %v1242 = vpop.xlane.xlu0 %1241
        %v1243 = vsel %vm1055, %v1233, -inf
        %1244 = vmax.xlane.f32.xlu0 %v1243
        %v1245 = vpop.xlane.xlu0 %1244
        %v1246 = vsub.f32 %v1230, %v1236
        %v1247 = vsub.f32 %v1231, %v1239
        %v1248 = vsub.f32 %v1232, %v1242
        %v1249 = vsub.f32 %v1233, %v1245
        %v1250 = vmul.f32 %v1246, 1.442695
        %v1251 = vpow.pop %v1250
        %v1252 = vmul.f32 %v1247, 1.442695
        %v1253 = vpow.pop %v1252
        %v1254 = vmul.f32 %v1248, 1.442695
        %v1255 = vpow.pop %v1254
        %v1256 = vmul.f32 %v1249, 1.442695
        %v1257 = vpow.pop %v1256
        %v1258 = vsel %vm1055, %v1251, 0.0
        %1259 = vadd.xlane.f32.xlu0 %v1258
        %v1260 = vpop.xlane.xlu0 %1259
        %v1261 = vsel %vm1055, %v1253, 0.0
        %1262 = vadd.xlane.f32.xlu0 %v1261
        %v1263 = vpop.xlane.xlu0 %1262
        %v1264 = vsel %vm1055, %v1255, 0.0
        %1265 = vadd.xlane.f32.xlu0 %v1264
        %v1266 = vpop.xlane.xlu0 %1265
        %v1267 = vsel %vm1055, %v1257, 0.0
        %1268 = vadd.xlane.f32.xlu0 %v1267
        %v1269 = vpop.xlane.xlu0 %1268
        %v1270 = vrcp.pop %v1260
        %v1271 = vrcp.pop %v1263
        %v1272 = vrcp.pop %v1266
        %v1273 = vrcp.pop %v1269
        %v1274 = vmul.f32 %v1251, %v1270
        %v1275 = vmul.f32 %v1253, %v1271
        %v1276 = vmul.f32 %v1255, %v1272
        %v1277 = vmul.f32 %v1257, %v1273
        %v1278 = vpack.c.bf16 %v1275, %v1274
        %v1279 = vpack.c.bf16 %v1277, %v1276
        %1282 = vrot.lane.b32.xlu0 %v971, 112
        %v1283 = vpop.permute.xlu0 %1282
        %1284 = vrot.lane.b32.xlu0 %v972, 112
        %v1285 = vpop.permute.xlu0 %1284
        %v1289 = vsel %vm1055, %v1278, 0
        %v1292 = vsel %vm1055, %v1279, 0
        %1294 = vmatprep.subr.bf16.mxu0 0
        %1295 = vmatpush1.bf16.msra.mxu0 %v1283
        %1296 = vmatprep.subr.bf16.mxu0 0
        %1297 = vmatpush1.bf16.msra.mxu0 %v1285
        %1298 = vmatprep.subr.bf16.mxu0 0
        %1299 = vmatpush1.bf16.msra.mxu0 0
        %1300 = vmatprep.subr.bf16.mxu0 0
        %1301 = vmatpush1.bf16.msra.mxu0 0
        %1302 = vmatprep.subr.bf16.mxu0 0
        %1303 = vmatpush1.bf16.msra.mxu0 0
        %1304 = vmatprep.subr.bf16.mxu0 0
        %1305 = vmatpush1.bf16.msra.mxu0 0
        %1306 = vmatprep.subr.bf16.mxu0 0
        %1307 = vmatpush1.bf16.msra.mxu0 0
        %1308 = vmatprep.subr.bf16.mxu0 0
        %1309 = vmatpush1.bf16.msra.mxu0 0
        %1310 = vmatprep.subr.bf16.mxu0 0
        %1311 = vmatpush1.bf16.msra.mxu0 0
        %1312 = vmatprep.subr.bf16.mxu0 0
        %1313 = vmatpush1.bf16.msra.mxu0 0
        %1314 = vmatprep.subr.bf16.mxu0 0
        %1315 = vmatpush1.bf16.msra.mxu0 0
        %1316 = vmatprep.subr.bf16.mxu0 0
        %1317 = vmatpush1.bf16.msra.mxu0 0
        %1318 = vmatprep.subr.bf16.mxu0 0
        %1319 = vmatpush1.bf16.msra.mxu0 0
        %1320 = vmatprep.subr.bf16.mxu0 0
        %1321 = vmatpush1.bf16.msra.mxu0 0
        %1322 = vmatprep.subr.bf16.mxu0 0
        %1323 = vmatpush1.bf16.msra.mxu0 0
        %1324 = vmatprep.subr.bf16.mxu0 0
        %1325 = vmatpush1.bf16.msra.mxu0 0
        %1326 = vmatprep.mubr.bf16.mxu0 0
        %1327 = vmatmul.mubr.bf16.gmra.mrb[0].mxu0 %v1289
        %v1328 = vpop.f32.mrb[0].mxu0
        %v1329 = vadd.f32 0.0, %v1328
        %v1330 = vpop.f32.mrb[0].mxu0
        %v1331 = vpop.f32.mrb[0].mxu0
        %v1332 = vadd.f32 0.0, %v1331
        %v1333 = vpop.f32.mrb[0].mxu0
        %1334 = vmatprep.mubr.bf16.mxu0 0
        %1335 = vmatmul.mubr.bf16.gmra.mrb[0].mxu0 %v1292
        %v1336 = vpop.f32.mrb[0].mxu0
        %v1337 = vadd.f32 0.0, %v1336
        %v1338 = vpop.f32.mrb[0].mxu0
        %v1339 = vpop.f32.mrb[0].mxu0
        %v1340 = vadd.f32 0.0, %v1339
        %v1341 = vpop.f32.mrb[0].mxu0
        %1342 = vdwg.mxu0
        %1343 = vrot.lane.b32.xlu0 %v969, 96
        %v1344 = vpop.permute.xlu0 %1343
        %1345 = vrot.lane.b32.xlu0 %v970, 96
        %v1346 = vpop.permute.xlu0 %1345
        %1347 = vrot.lane.b32.xlu0 %v969, 32
        %v1348 = vpop.permute.xlu0 %1347
        %1349 = vrot.lane.b32.xlu0 %v970, 32
        %v1350 = vpop.permute.xlu0 %1349
        %v1352 = vsel %vm979, %v1344, 0
        %v1355 = vsel %vm979, %v1346, 0
        %v1358 = vsel %vm979, %v1348, 0
        %v1361 = vsel %vm979, %v1350, 0
        %1363 = vmatprep.subr.bf16.mxu0 0
        %1364 = vmatpush1.bf16.xpose.msra.mxu0 %v1358
        %1365 = vmatprep.subr.bf16.mxu0 0
        %1366 = vmatpush1.bf16.xpose.msra.mxu0 %v1361
        %1367 = vmatprep.subr.bf16.mxu0 0
        %1368 = vmatpush1.bf16.xpose.msra.mxu0 0
        %1369 = vmatprep.subr.bf16.mxu0 0
        %1370 = vmatpush1.bf16.xpose.msra.mxu0 0
        %1371 = vmatprep.subr.bf16.mxu0 0
        %1372 = vmatpush1.bf16.xpose.msra.mxu0 0
        %1373 = vmatprep.subr.bf16.mxu0 0
        %1374 = vmatpush1.bf16.xpose.msra.mxu0 0
        %1375 = vmatprep.subr.bf16.mxu0 0
        %1376 = vmatpush1.bf16.xpose.msra.mxu0 0
        %1377 = vmatprep.subr.bf16.mxu0 0
        %1378 = vmatpush1.bf16.xpose.msra.mxu0 0
        %1379 = vmatprep.subr.bf16.mxu0 0
        %1380 = vmatpush1.bf16.xpose.msra.mxu0 0
        %1381 = vmatprep.subr.bf16.mxu0 0
        %1382 = vmatpush1.bf16.xpose.msra.mxu0 0
        %1383 = vmatprep.subr.bf16.mxu0 0
        %1384 = vmatpush1.bf16.xpose.msra.mxu0 0
        %1385 = vmatprep.subr.bf16.mxu0 0
        %1386 = vmatpush1.bf16.xpose.msra.mxu0 0
        %1387 = vmatprep.subr.bf16.mxu0 0
        %1388 = vmatpush1.bf16.xpose.msra.mxu0 0
        %1389 = vmatprep.subr.bf16.mxu0 0
        %1390 = vmatpush1.bf16.xpose.msra.mxu0 0
        %1391 = vmatprep.subr.bf16.mxu0 0
        %1392 = vmatpush1.bf16.xpose.msra.mxu0 0
        %1393 = vmatprep.subr.bf16.mxu0 0
        %1394 = vmatpush1.bf16.xpose.msra.mxu0 0
        %1395 = vmatprep.mubr.bf16.mxu0 0
        %1396 = vmatmul.mubr.bf16.gmra.mrb[0].mxu0 %v1352
        %v1397 = vpop.f32.mrb[0].mxu0
        %v1398 = vadd.f32 0.0, %v1397
        %v1399 = vpop.f32.mrb[0].mxu0
        %v1400 = vpop.f32.mrb[0].mxu0
        %v1401 = vadd.f32 0.0, %v1400
        %v1402 = vpop.f32.mrb[0].mxu0
        %1403 = vmatprep.mubr.bf16.mxu0 0
        %1404 = vmatmul.mubr.bf16.gmra.mrb[0].mxu0 %v1355
        %v1405 = vpop.f32.mrb[0].mxu0
        %v1406 = vadd.f32 0.0, %v1405
        %v1407 = vpop.f32.mrb[0].mxu0
        %v1408 = vpop.f32.mrb[0].mxu0
        %v1409 = vadd.f32 0.0, %v1408
        %v1410 = vpop.f32.mrb[0].mxu0
        %1411 = vdwg.mxu0
        %v1412 = vmul.f32 %v1398, 0.25
        %v1413 = vmul.f32 %v1401, 0.25
        %v1414 = vmul.f32 %v1406, 0.25
        %v1415 = vmul.f32 %v1409, 0.25
        %v1416 = vadd.f32 %v1412, %v1049
        %v1417 = vadd.f32 %v1413, %v1049
        %v1418 = vadd.f32 %v1414, %v1049
        %v1419 = vadd.f32 %v1415, %v1049
        %v1420 = vsel %vm1055, %v1416, -inf
        %1421 = vmax.xlane.f32.xlu0 %v1420
        %v1422 = vpop.xlane.xlu0 %1421
        %v1423 = vsel %vm1055, %v1417, -inf
        %1424 = vmax.xlane.f32.xlu0 %v1423
        %v1425 = vpop.xlane.xlu0 %1424
        %v1426 = vsel %vm1055, %v1418, -inf
        %1427 = vmax.xlane.f32.xlu0 %v1426
        %v1428 = vpop.xlane.xlu0 %1427
        %v1429 = vsel %vm1055, %v1419, -inf
        %1430 = vmax.xlane.f32.xlu0 %v1429
        %v1431 = vpop.xlane.xlu0 %1430
        %v1432 = vsub.f32 %v1416, %v1422
        %v1433 = vsub.f32 %v1417, %v1425
        %v1434 = vsub.f32 %v1418, %v1428
        %v1435 = vsub.f32 %v1419, %v1431
        %v1436 = vmul.f32 %v1432, 1.442695
        %v1437 = vpow.pop %v1436
        %v1438 = vmul.f32 %v1433, 1.442695
        %v1439 = vpow.pop %v1438
        %v1440 = vmul.f32 %v1434, 1.442695
        %v1441 = vpow.pop %v1440
        %v1442 = vmul.f32 %v1435, 1.442695
        %v1443 = vpow.pop %v1442
        %v1444 = vsel %vm1055, %v1437, 0.0
        %1445 = vadd.xlane.f32.xlu0 %v1444
        %v1446 = vpop.xlane.xlu0 %1445
        %v1447 = vsel %vm1055, %v1439, 0.0
        %1448 = vadd.xlane.f32.xlu0 %v1447
        %v1449 = vpop.xlane.xlu0 %1448
        %v1450 = vsel %vm1055, %v1441, 0.0
        %1451 = vadd.xlane.f32.xlu0 %v1450
        %v1452 = vpop.xlane.xlu0 %1451
        %v1453 = vsel %vm1055, %v1443, 0.0
        %1454 = vadd.xlane.f32.xlu0 %v1453
        %v1455 = vpop.xlane.xlu0 %1454
        %v1456 = vrcp.pop %v1446
        %v1457 = vrcp.pop %v1449
        %v1458 = vrcp.pop %v1452
        %v1459 = vrcp.pop %v1455
        %v1460 = vmul.f32 %v1437, %v1456
        %v1461 = vmul.f32 %v1439, %v1457
        %v1462 = vmul.f32 %v1441, %v1458
        %v1463 = vmul.f32 %v1443, %v1459
        %v1464 = vpack.c.bf16 %v1461, %v1460
        %v1465 = vpack.c.bf16 %v1463, %v1462
        %1466 = vrot.lane.b32.xlu0 %v971, 96
        %v1467 = vpop.permute.xlu0 %1466
        %1468 = vrot.lane.b32.xlu0 %v972, 96
        %v1469 = vpop.permute.xlu0 %1468
        %v1473 = vsel %vm1055, %v1464, 0
        %v1476 = vsel %vm1055, %v1465, 0
        %1478 = vmatprep.subr.bf16.mxu0 0
        %1479 = vmatpush1.bf16.msra.mxu0 %v1467
        %1480 = vmatprep.subr.bf16.mxu0 0
        %1481 = vmatpush1.bf16.msra.mxu0 %v1469
        %1482 = vmatprep.subr.bf16.mxu0 0
        %1483 = vmatpush1.bf16.msra.mxu0 0
        %1484 = vmatprep.subr.bf16.mxu0 0
        %1485 = vmatpush1.bf16.msra.mxu0 0
        %1486 = vmatprep.subr.bf16.mxu0 0
        %1487 = vmatpush1.bf16.msra.mxu0 0
        %1488 = vmatprep.subr.bf16.mxu0 0
        %1489 = vmatpush1.bf16.msra.mxu0 0
        %1490 = vmatprep.subr.bf16.mxu0 0
        %1491 = vmatpush1.bf16.msra.mxu0 0
        %1492 = vmatprep.subr.bf16.mxu0 0
        %1493 = vmatpush1.bf16.msra.mxu0 0
        %1494 = vmatprep.subr.bf16.mxu0 0
        %1495 = vmatpush1.bf16.msra.mxu0 0
        %1496 = vmatprep.subr.bf16.mxu0 0
        %1497 = vmatpush1.bf16.msra.mxu0 0
        %1498 = vmatprep.subr.bf16.mxu0 0
        %1499 = vmatpush1.bf16.msra.mxu0 0
        %1500 = vmatprep.subr.bf16.mxu0 0
        %1501 = vmatpush1.bf16.msra.mxu0 0
        %1502 = vmatprep.subr.bf16.mxu0 0
        %1503 = vmatpush1.bf16.msra.mxu0 0
        %1504 = vmatprep.subr.bf16.mxu0 0
        %1505 = vmatpush1.bf16.msra.mxu0 0
        %1506 = vmatprep.subr.bf16.mxu0 0
        %1507 = vmatpush1.bf16.msra.mxu0 0
        %1508 = vmatprep.subr.bf16.mxu0 0
        %1509 = vmatpush1.bf16.msra.mxu0 0
        %1510 = vmatprep.mubr.bf16.mxu0 0
        %1511 = vmatmul.mubr.bf16.gmra.mrb[0].mxu0 %v1473
        %v1512 = vpop.f32.mrb[0].mxu0
        %v1513 = vadd.f32 0.0, %v1512
        %v1514 = vpop.f32.mrb[0].mxu0
        %v1515 = vpop.f32.mrb[0].mxu0
        %v1516 = vadd.f32 0.0, %v1515
        %v1517 = vpop.f32.mrb[0].mxu0
        %1518 = vmatprep.mubr.bf16.mxu0 0
        %1519 = vmatmul.mubr.bf16.gmra.mrb[0].mxu0 %v1476
        %v1520 = vpop.f32.mrb[0].mxu0
        %v1521 = vadd.f32 0.0, %v1520
        %v1522 = vpop.f32.mrb[0].mxu0
        %v1523 = vpop.f32.mrb[0].mxu0
        %v1524 = vadd.f32 0.0, %v1523
        %v1525 = vpop.f32.mrb[0].mxu0
        %1526 = vdwg.mxu0
        %1527 = vrot.lane.b32.xlu0 %v969, 80
        %v1528 = vpop.permute.xlu0 %1527
        %1529 = vrot.lane.b32.xlu0 %v970, 80
        %v1530 = vpop.permute.xlu0 %1529
        %1531 = vrot.lane.b32.xlu0 %v969, 16
        %v1532 = vpop.permute.xlu0 %1531
        %1533 = vrot.lane.b32.xlu0 %v970, 16
        %v1534 = vpop.permute.xlu0 %1533
        %v1536 = vsel %vm979, %v1528, 0
        %v1539 = vsel %vm979, %v1530, 0
        %v1542 = vsel %vm979, %v1532, 0
        %v1545 = vsel %vm979, %v1534, 0
        %1547 = vmatprep.subr.bf16.mxu0 0
        %1548 = vmatpush1.bf16.xpose.msra.mxu0 %v1542
        %1549 = vmatprep.subr.bf16.mxu0 0
        %1550 = vmatpush1.bf16.xpose.msra.mxu0 %v1545
        %1551 = vmatprep.subr.bf16.mxu0 0
        %1552 = vmatpush1.bf16.xpose.msra.mxu0 0
        %1553 = vmatprep.subr.bf16.mxu0 0
        %1554 = vmatpush1.bf16.xpose.msra.mxu0 0
        %1555 = vmatprep.subr.bf16.mxu0 0
        %1556 = vmatpush1.bf16.xpose.msra.mxu0 0
        %1557 = vmatprep.subr.bf16.mxu0 0
        %1558 = vmatpush1.bf16.xpose.msra.mxu0 0
        %1559 = vmatprep.subr.bf16.mxu0 0
        %1560 = vmatpush1.bf16.xpose.msra.mxu0 0
        %1561 = vmatprep.subr.bf16.mxu0 0
        %1562 = vmatpush1.bf16.xpose.msra.mxu0 0
        %1563 = vmatprep.subr.bf16.mxu0 0
        %1564 = vmatpush1.bf16.xpose.msra.mxu0 0
        %1565 = vmatprep.subr.bf16.mxu0 0
        %1566 = vmatpush1.bf16.xpose.msra.mxu0 0
        %1567 = vmatprep.subr.bf16.mxu0 0
        %1568 = vmatpush1.bf16.xpose.msra.mxu0 0
        %1569 = vmatprep.subr.bf16.mxu0 0
        %1570 = vmatpush1.bf16.xpose.msra.mxu0 0
        %1571 = vmatprep.subr.bf16.mxu0 0
        %1572 = vmatpush1.bf16.xpose.msra.mxu0 0
        %1573 = vmatprep.subr.bf16.mxu0 0
        %1574 = vmatpush1.bf16.xpose.msra.mxu0 0
        %1575 = vmatprep.subr.bf16.mxu0 0
        %1576 = vmatpush1.bf16.xpose.msra.mxu0 0
        %1577 = vmatprep.subr.bf16.mxu0 0
        %1578 = vmatpush1.bf16.xpose.msra.mxu0 0
        %1579 = vmatprep.mubr.bf16.mxu0 0
        %1580 = vmatmul.mubr.bf16.gmra.mrb[0].mxu0 %v1536
        %v1581 = vpop.f32.mrb[0].mxu0
        %v1582 = vadd.f32 0.0, %v1581
        %v1583 = vpop.f32.mrb[0].mxu0
        %v1584 = vpop.f32.mrb[0].mxu0
        %v1585 = vadd.f32 0.0, %v1584
        %v1586 = vpop.f32.mrb[0].mxu0
        %1587 = vmatprep.mubr.bf16.mxu0 0
        %1588 = vmatmul.mubr.bf16.gmra.mrb[0].mxu0 %v1539
        %v1589 = vpop.f32.mrb[0].mxu0
        %v1590 = vadd.f32 0.0, %v1589
        %v1591 = vpop.f32.mrb[0].mxu0
        %v1592 = vpop.f32.mrb[0].mxu0
        %v1593 = vadd.f32 0.0, %v1592
        %v1594 = vpop.f32.mrb[0].mxu0
        %1595 = vdwg.mxu0
        %v1596 = vmul.f32 %v1582, 0.25
        %v1597 = vmul.f32 %v1585, 0.25
        %v1598 = vmul.f32 %v1590, 0.25
        %v1599 = vmul.f32 %v1593, 0.25
        %v1600 = vadd.f32 %v1596, %v1049
        %v1601 = vadd.f32 %v1597, %v1049
        %v1602 = vadd.f32 %v1598, %v1049
        %v1603 = vadd.f32 %v1599, %v1049
        %v1604 = vsel %vm1055, %v1600, -inf
        %1605 = vmax.xlane.f32.xlu0 %v1604
        %v1606 = vpop.xlane.xlu0 %1605
        %v1607 = vsel %vm1055, %v1601, -inf
        %1608 = vmax.xlane.f32.xlu0 %v1607
        %v1609 = vpop.xlane.xlu0 %1608
        %v1610 = vsel %vm1055, %v1602, -inf
        %1611 = vmax.xlane.f32.xlu0 %v1610
        %v1612 = vpop.xlane.xlu0 %1611
        %v1613 = vsel %vm1055, %v1603, -inf
        %1614 = vmax.xlane.f32.xlu0 %v1613
        %v1615 = vpop.xlane.xlu0 %1614
        %v1616 = vsub.f32 %v1600, %v1606
        %v1617 = vsub.f32 %v1601, %v1609
        %v1618 = vsub.f32 %v1602, %v1612
        %v1619 = vsub.f32 %v1603, %v1615
        %v1620 = vmul.f32 %v1616, 1.442695
        %v1621 = vpow.pop %v1620
        %v1622 = vmul.f32 %v1617, 1.442695
        %v1623 = vpow.pop %v1622
        %v1624 = vmul.f32 %v1618, 1.442695
        %v1625 = vpow.pop %v1624
        %v1626 = vmul.f32 %v1619, 1.442695
        %v1627 = vpow.pop %v1626
        %v1628 = vsel %vm1055, %v1621, 0.0
        %1629 = vadd.xlane.f32.xlu0 %v1628
        %v1630 = vpop.xlane.xlu0 %1629
        %v1631 = vsel %vm1055, %v1623, 0.0
        %1632 = vadd.xlane.f32.xlu0 %v1631
        %v1633 = vpop.xlane.xlu0 %1632
        %v1634 = vsel %vm1055, %v1625, 0.0
        %1635 = vadd.xlane.f32.xlu0 %v1634
        %v1636 = vpop.xlane.xlu0 %1635
        %v1637 = vsel %vm1055, %v1627, 0.0
        %1638 = vadd.xlane.f32.xlu0 %v1637
        %v1639 = vpop.xlane.xlu0 %1638
        %v1640 = vrcp.pop %v1630
        %v1641 = vrcp.pop %v1633
        %v1642 = vrcp.pop %v1636
        %v1643 = vrcp.pop %v1639
        %v1644 = vmul.f32 %v1621, %v1640
        %v1645 = vmul.f32 %v1623, %v1641
        %v1646 = vmul.f32 %v1625, %v1642
        %v1647 = vmul.f32 %v1627, %v1643
        %v1648 = vpack.c.bf16 %v1645, %v1644
        %v1649 = vpack.c.bf16 %v1647, %v1646
        %1650 = vrot.lane.b32.xlu0 %v971, 80
        %v1651 = vpop.permute.xlu0 %1650
        %1652 = vrot.lane.b32.xlu0 %v972, 80
        %v1653 = vpop.permute.xlu0 %1652
        %v1657 = vsel %vm1055, %v1648, 0
        %v1660 = vsel %vm1055, %v1649, 0
        %1662 = vmatprep.subr.bf16.mxu0 0
        %1663 = vmatpush1.bf16.msra.mxu0 %v1651
        %1664 = vmatprep.subr.bf16.mxu0 0
        %1665 = vmatpush1.bf16.msra.mxu0 %v1653
        %1666 = vmatprep.subr.bf16.mxu0 0
        %1667 = vmatpush1.bf16.msra.mxu0 0
        %1668 = vmatprep.subr.bf16.mxu0 0
        %1669 = vmatpush1.bf16.msra.mxu0 0
        %1670 = vmatprep.subr.bf16.mxu0 0
        %1671 = vmatpush1.bf16.msra.mxu0 0
        %1672 = vmatprep.subr.bf16.mxu0 0
        %1673 = vmatpush1.bf16.msra.mxu0 0
        %1674 = vmatprep.subr.bf16.mxu0 0
        %1675 = vmatpush1.bf16.msra.mxu0 0
        %1676 = vmatprep.subr.bf16.mxu0 0
        %1677 = vmatpush1.bf16.msra.mxu0 0
        %1678 = vmatprep.subr.bf16.mxu0 0
        %1679 = vmatpush1.bf16.msra.mxu0 0
        %1680 = vmatprep.subr.bf16.mxu0 0
        %1681 = vmatpush1.bf16.msra.mxu0 0
        %1682 = vmatprep.subr.bf16.mxu0 0
        %1683 = vmatpush1.bf16.msra.mxu0 0
        %1684 = vmatprep.subr.bf16.mxu0 0
        %1685 = vmatpush1.bf16.msra.mxu0 0
        %1686 = vmatprep.subr.bf16.mxu0 0
        %1687 = vmatpush1.bf16.msra.mxu0 0
        %1688 = vmatprep.subr.bf16.mxu0 0
        %1689 = vmatpush1.bf16.msra.mxu0 0
        %1690 = vmatprep.subr.bf16.mxu0 0
        %1691 = vmatpush1.bf16.msra.mxu0 0
        %1692 = vmatprep.subr.bf16.mxu0 0
        %1693 = vmatpush1.bf16.msra.mxu0 0
        %1694 = vmatprep.mubr.bf16.mxu0 0
        %1695 = vmatmul.mubr.bf16.gmra.mrb[0].mxu0 %v1657
        %v1696 = vpop.f32.mrb[0].mxu0
        %v1697 = vadd.f32 0.0, %v1696
        %v1698 = vpop.f32.mrb[0].mxu0
        %v1699 = vpop.f32.mrb[0].mxu0
        %v1700 = vadd.f32 0.0, %v1699
        %v1701 = vpop.f32.mrb[0].mxu0
        %1702 = vmatprep.mubr.bf16.mxu0 0
        %1703 = vmatmul.mubr.bf16.gmra.mrb[0].mxu0 %v1660
        %v1704 = vpop.f32.mrb[0].mxu0
        %v1705 = vadd.f32 0.0, %v1704
        %v1706 = vpop.f32.mrb[0].mxu0
        %v1707 = vpop.f32.mrb[0].mxu0
        %v1708 = vadd.f32 0.0, %v1707
        %v1709 = vpop.f32.mrb[0].mxu0
        %1710 = vdwg.mxu0
        %1715 = vrot.lane.b32.xlu0 %v1329, 16
        %v1716 = vpop.permute.xlu0 %1715
        %1717 = vrot.lane.b32.xlu0 %v1332, 16
        %v1718 = vpop.permute.xlu0 %1717
        %1719 = vrot.lane.b32.xlu0 %v1337, 16
        %v1720 = vpop.permute.xlu0 %1719
        %1721 = vrot.lane.b32.xlu0 %v1340, 16
        %v1722 = vpop.permute.xlu0 %1721
        %1731 = vrot.lane.b32.xlu0 %v1513, 32
        %v1732 = vpop.permute.xlu0 %1731
        %1733 = vrot.lane.b32.xlu0 %v1516, 32
        %v1734 = vpop.permute.xlu0 %1733
        %1735 = vrot.lane.b32.xlu0 %v1521, 32
        %v1736 = vpop.permute.xlu0 %1735
        %1737 = vrot.lane.b32.xlu0 %v1524, 32
        %v1738 = vpop.permute.xlu0 %1737
        %1747 = vrot.lane.b32.xlu0 %v1697, 48
        %v1748 = vpop.permute.xlu0 %1747
        %1749 = vrot.lane.b32.xlu0 %v1700, 48
        %v1750 = vpop.permute.xlu0 %1749
        %1751 = vrot.lane.b32.xlu0 %v1705, 48
        %v1752 = vpop.permute.xlu0 %1751
        %1753 = vrot.lane.b32.xlu0 %v1708, 48
        %v1754 = vpop.permute.xlu0 %1753
        %v1759 = vsel %vm979, %v1143, %v1716
        %v1760 = vsel %vm979, %v1146, %v1718
        %v1761 = vsel %vm979, %v1151, %v1720
        %v1762 = vsel %vm979, %v1154, %v1722
        %v1763 = vsel %vm1055, %v1759, %v1732
        %v1764 = vsel %vm1055, %v1760, %v1734
        %v1765 = vsel %vm1055, %v1761, %v1736
        %v1766 = vsel %vm1055, %v1762, %v1738
        %vm1767 = vcmask 392192
        %v1768 = vsel %vm1767, %v1763, %v1748
        %v1769 = vsel %vm1767, %v1764, %v1750
        %v1770 = vsel %vm1767, %v1765, %v1752
        %v1771 = vsel %vm1767, %v1766, %v1754
        %v1772 = vpack.c.bf16 %v1769, %v1768
        %v1773 = vpack.c.bf16 %v1771, %v1770
        %v1774 = vld [vmem:[%s726] sm:$0xf]
        %v1775 = vld [vmem:[%s726 + $0x4] sm:$0xf]
        %v1776 = vld [vmem:[%s726 + $0x8] sm:$0xf]
        %v1777 = vld [vmem:[%s726 + $0xc] sm:$0xf]
        %v1778 = vld [vmem:[%s726 + $0x10] sm:$0xf]
        %v1779 = vld [vmem:[%s726 + $0x14] sm:$0xf]
        %v1780 = vld [vmem:[%s726 + $0x18] sm:$0xf]
        %v1781 = vld [vmem:[%s726 + $0x1c] sm:$0xf]
        %v1782 = vld [vmem:[%s729] sm:$0x1]
        %v1784 = vlaneseq
        %v1785 = vshrl.u32 %v1784, 7
        %v1786 = vsub.s32 0, %v1785
        %v1787 = vrot.slane %v1782, %v1786
        %v1797 = vunpack.c.l.b16 %v1774
        %v1798 = vunpack.c.l.b16 %v1775
        %v1799 = vunpack.c.l.b16 %v1776
        %v1800 = vunpack.c.l.b16 %v1777
        %v1801 = vunpack.c.l.b16 %v1778
        %v1802 = vunpack.c.l.b16 %v1779
        %v1803 = vunpack.c.l.b16 %v1780
        %v1804 = vunpack.c.l.b16 %v1781
        %v1805 = vpack.c.b16 %v1798, %v1797
        %v1806 = vpack.c.b16 %v1800, %v1799
        %v1807 = vpack.c.b16 %v1802, %v1801
        %v1808 = vpack.c.b16 %v1804, %v1803
        %v1814 = vsel %vm908, %v1772, 0
        %v1817 = vsel %vm908, %v1773, 0
        %1819 = vmatprep.subr.bf16.mxu0 0
        %1820 = vmatpush1.bf16.msra.mxu0 %v1805
        %1821 = vmatprep.subr.bf16.mxu0 0
        %1822 = vmatpush1.bf16.msra.mxu0 %v1806
        %1823 = vmatprep.subr.bf16.mxu0 0
        %1824 = vmatpush1.bf16.msra.mxu0 %v1807
        %1825 = vmatprep.subr.bf16.mxu0 0
        %1826 = vmatpush1.bf16.msra.mxu0 %v1808
        %1827 = vmatprep.subr.bf16.mxu0 0
        %1828 = vmatpush1.bf16.msra.mxu0 0
        %1829 = vmatprep.subr.bf16.mxu0 0
        %1830 = vmatpush1.bf16.msra.mxu0 0
        %1831 = vmatprep.subr.bf16.mxu0 0
        %1832 = vmatpush1.bf16.msra.mxu0 0
        %1833 = vmatprep.subr.bf16.mxu0 0
        %1834 = vmatpush1.bf16.msra.mxu0 0
        %1835 = vmatprep.subr.bf16.mxu0 0
        %1836 = vmatpush1.bf16.msra.mxu0 0
        %1837 = vmatprep.subr.bf16.mxu0 0
        %1838 = vmatpush1.bf16.msra.mxu0 0
        %1839 = vmatprep.subr.bf16.mxu0 0
        %1840 = vmatpush1.bf16.msra.mxu0 0
        %1841 = vmatprep.subr.bf16.mxu0 0
        %1842 = vmatpush1.bf16.msra.mxu0 0
        %1843 = vmatprep.subr.bf16.mxu0 0
        %1844 = vmatpush1.bf16.msra.mxu0 0
        %1845 = vmatprep.subr.bf16.mxu0 0
        %1846 = vmatpush1.bf16.msra.mxu0 0
        %1847 = vmatprep.subr.bf16.mxu0 0
        %1848 = vmatpush1.bf16.msra.mxu0 0
        %1849 = vmatprep.subr.bf16.mxu0 0
        %1850 = vmatpush1.bf16.msra.mxu0 0
        %1851 = vmatprep.mubr.bf16.mxu0 0
        %1852 = vmatmul.mubr.bf16.gmra.mrb[0].mxu0 %v1814
        %v1853 = vpop.f32.mrb[0].mxu0
        %v1854 = vadd.f32 %v1787, %v1853
        %v1855 = vpop.f32.mrb[0].mxu0
        %v1856 = vpop.f32.mrb[0].mxu0
        %v1857 = vadd.f32 %v1787, %v1856
        %v1858 = vpop.f32.mrb[0].mxu0
        %1859 = vmatprep.mubr.bf16.mxu0 0
        %1860 = vmatmul.mubr.bf16.gmra.mrb[0].mxu0 %v1817
        %v1861 = vpop.f32.mrb[0].mxu0
        %v1862 = vadd.f32 %v1787, %v1861
        %v1863 = vpop.f32.mrb[0].mxu0
        %v1864 = vpop.f32.mrb[0].mxu0
        %v1865 = vadd.f32 %v1787, %v1864
        %v1866 = vpop.f32.mrb[0].mxu0
        %1867 = vdwg.mxu0
        %v1868 = vadd.f32 %v1854, %v842
        %v1869 = vadd.f32 %v1857, %v843
        %v1870 = vadd.f32 %v1862, %v844
        %v1871 = vadd.f32 %v1865, %v845
        %v1872 = vld [vmem:[%s732] sm:$0x1]
        %v1873 = vld [vmem:[%s735] sm:$0x1]
        %v1874 = vsel %vm908, %v1868, 0.0
        %1875 = vadd.xlane.f32.xlu0 %v1874
        %v1876 = vpop.xlane.xlu0 %1875
        %v1877 = vsel %vm908, %v1869, 0.0
        %1878 = vadd.xlane.f32.xlu0 %v1877
        %v1879 = vpop.xlane.xlu0 %1878
        %v1880 = vsel %vm908, %v1870, 0.0
        %1881 = vadd.xlane.f32.xlu0 %v1880
        %v1882 = vpop.xlane.xlu0 %1881
        %v1883 = vsel %vm908, %v1871, 0.0
        %1884 = vadd.xlane.f32.xlu0 %v1883
        %v1885 = vpop.xlane.xlu0 %1884
        %v1886 = vrcp.pop 64.0
        %v1887 = vmul.f32 %v1876, %v1886
        %v1888 = vmul.f32 %v1879, %v1886
        %v1889 = vmul.f32 %v1882, %v1886
        %v1890 = vmul.f32 %v1885, %v1886
        %v1891 = vsub.f32 %v1868, %v1887
        %v1892 = vsub.f32 %v1869, %v1888
        %v1893 = vsub.f32 %v1870, %v1889
        %v1894 = vsub.f32 %v1871, %v1890
        %v1895 = vmul.f32 %v1891, %v1891
        %v1896 = vmul.f32 %v1892, %v1892
        %v1897 = vmul.f32 %v1893, %v1893
        %v1898 = vmul.f32 %v1894, %v1894
        %v1899 = vsel %vm908, %v1895, 0.0
        %1900 = vadd.xlane.f32.xlu0 %v1899
        %v1901 = vpop.xlane.xlu0 %1900
        %v1902 = vsel %vm908, %v1896, 0.0
        %1903 = vadd.xlane.f32.xlu0 %v1902
        %v1904 = vpop.xlane.xlu0 %1903
        %v1905 = vsel %vm908, %v1897, 0.0
        %1906 = vadd.xlane.f32.xlu0 %v1905
        %v1907 = vpop.xlane.xlu0 %1906
        %v1908 = vsel %vm908, %v1898, 0.0
        %1909 = vadd.xlane.f32.xlu0 %v1908
        %v1910 = vpop.xlane.xlu0 %1909
        %v1911 = vmul.f32 %v1901, %v1886
        %v1912 = vmul.f32 %v1904, %v1886
        %v1913 = vmul.f32 %v1907, %v1886
        %v1914 = vmul.f32 %v1910, %v1886
        %v1915 = vadd.f32 %v1911, 1e-12
        %v1916 = vadd.f32 %v1912, 1e-12
        %v1917 = vadd.f32 %v1913, 1e-12
        %v1918 = vadd.f32 %v1914, 1e-12
        %v1919 = vrsqrt.pop %v1915
        %v1920 = vrsqrt.pop %v1916
        %v1921 = vrsqrt.pop %v1917
        %v1922 = vrsqrt.pop %v1918
        %v1923 = vmul.f32 %v1891, %v1919
        %v1924 = vmul.f32 %v1892, %v1920
        %v1925 = vmul.f32 %v1893, %v1921
        %v1926 = vmul.f32 %v1894, %v1922
        %v1928 = vlaneseq
        %v1929 = vshrl.u32 %v1928, 7
        %v1930 = vsub.s32 0, %v1929
        %v1931 = vrot.slane %v1872, %v1930
        %v1933 = vmul.f32 %v1923, %v1931
        %v1934 = vmul.f32 %v1924, %v1931
        %v1935 = vmul.f32 %v1925, %v1931
        %v1936 = vmul.f32 %v1926, %v1931
        %v1938 = vlaneseq
        %v1939 = vshrl.u32 %v1938, 7
        %v1940 = vsub.s32 0, %v1939
        %v1941 = vrot.slane %v1873, %v1940
        %v1943 = vadd.f32 %v1933, %v1941
        %v1944 = vadd.f32 %v1934, %v1941
        %v1945 = vadd.f32 %v1935, %v1941
        %v1946 = vadd.f32 %v1936, %v1941
        %v1947 = vpack.c.bf16 %v1944, %v1943
        %v1948 = vpack.c.bf16 %v1946, %v1945
        %v1949 = vld [vmem:[%s629] sm:$0xf]
        %v1950 = vld [vmem:[%s629 + $0x4] sm:$0xf]
        %v1951 = vld [vmem:[%s629 + $0x8] sm:$0xf]
        %v1952 = vld [vmem:[%s629 + $0xc] sm:$0xf]
        %v1953 = vld [vmem:[%s629 + $0x10] sm:$0xf]
        %v1954 = vld [vmem:[%s629 + $0x14] sm:$0xf]
        %v1955 = vld [vmem:[%s629 + $0x18] sm:$0xf]
        %v1956 = vld [vmem:[%s629 + $0x1c] sm:$0xf]
        %v1957 = vld [vmem:[%s738] sm:$0x1]
        %v1959 = vlaneseq
        %v1960 = vshrl.u32 %v1959, 7
        %v1961 = vsub.s32 0, %v1960
        %v1962 = vrot.slane %v1957, %v1961
        %v1972 = vunpack.c.l.b16 %v1949
        %v1973 = vunpack.c.l.b16 %v1950
        %v1974 = vunpack.c.l.b16 %v1951
        %v1975 = vunpack.c.l.b16 %v1952
        %v1976 = vunpack.c.l.b16 %v1953
        %v1977 = vunpack.c.l.b16 %v1954
        %v1978 = vunpack.c.l.b16 %v1955
        %v1979 = vunpack.c.l.b16 %v1956
        %v1980 = vpack.c.b16 %v1973, %v1972
        %v1981 = vpack.c.b16 %v1975, %v1974
        %v1982 = vpack.c.b16 %v1977, %v1976
        %v1983 = vpack.c.b16 %v1979, %v1978
        %v1989 = vsel %vm908, %v1947, 0
        %v1992 = vsel %vm908, %v1948, 0
        %1994 = vmatprep.subr.bf16.mxu0 0
        %1995 = vmatpush1.bf16.msra.mxu0 %v1980
        %1996 = vmatprep.subr.bf16.mxu0 0
        %1997 = vmatpush1.bf16.msra.mxu0 %v1981
        %1998 = vmatprep.subr.bf16.mxu0 0
        %1999 = vmatpush1.bf16.msra.mxu0 %v1982
        %2000 = vmatprep.subr.bf16.mxu0 0
        %2001 = vmatpush1.bf16.msra.mxu0 %v1983
        %2002 = vmatprep.subr.bf16.mxu0 0
        %2003 = vmatpush1.bf16.msra.mxu0 0
        %2004 = vmatprep.subr.bf16.mxu0 0
        %2005 = vmatpush1.bf16.msra.mxu0 0
        %2006 = vmatprep.subr.bf16.mxu0 0
        %2007 = vmatpush1.bf16.msra.mxu0 0
        %2008 = vmatprep.subr.bf16.mxu0 0
        %2009 = vmatpush1.bf16.msra.mxu0 0
        %2010 = vmatprep.subr.bf16.mxu0 0
        %2011 = vmatpush1.bf16.msra.mxu0 0
        %2012 = vmatprep.subr.bf16.mxu0 0
        %2013 = vmatpush1.bf16.msra.mxu0 0
        %2014 = vmatprep.subr.bf16.mxu0 0
        %2015 = vmatpush1.bf16.msra.mxu0 0
        %2016 = vmatprep.subr.bf16.mxu0 0
        %2017 = vmatpush1.bf16.msra.mxu0 0
        %2018 = vmatprep.subr.bf16.mxu0 0
        %2019 = vmatpush1.bf16.msra.mxu0 0
        %2020 = vmatprep.subr.bf16.mxu0 0
        %2021 = vmatpush1.bf16.msra.mxu0 0
        %2022 = vmatprep.subr.bf16.mxu0 0
        %2023 = vmatpush1.bf16.msra.mxu0 0
        %2024 = vmatprep.subr.bf16.mxu0 0
        %2025 = vmatpush1.bf16.msra.mxu0 0
        %2026 = vmatprep.mubr.bf16.mxu0 0
        %2027 = vmatmul.mubr.bf16.gmra.mrb[0].mxu0 %v1989
        %v2028 = vpop.f32.mrb[0].mxu0
        %v2029 = vadd.f32 %v1962, %v2028
        %v2030 = vpop.f32.mrb[0].mxu0
        %v2031 = vpop.f32.mrb[0].mxu0
        %v2032 = vadd.f32 %v1962, %v2031
        %v2033 = vpop.f32.mrb[0].mxu0
        %2034 = vmatprep.mubr.bf16.mxu0 0
        %2035 = vmatmul.mubr.bf16.gmra.mrb[0].mxu0 %v1992
        %v2036 = vpop.f32.mrb[0].mxu0
        %v2037 = vadd.f32 %v1962, %v2036
        %v2038 = vpop.f32.mrb[0].mxu0
        %v2039 = vpop.f32.mrb[0].mxu0
        %v2040 = vadd.f32 %v1962, %v2039
        %v2041 = vpop.f32.mrb[0].mxu0
        %2042 = vdwg.mxu0
        %v2043 = vmul.f32 %v2029, 0.5
        %v2044 = vmul.f32 %v2032, 0.5
        %v2045 = vmul.f32 %v2037, 0.5
        %v2046 = vmul.f32 %v2040, 0.5
        %v2047 = vmul.f32 %v2029, 0.044715
        %v2048 = vmul.f32 %v2032, 0.044715
        %v2049 = vmul.f32 %v2037, 0.044715
        %v2050 = vmul.f32 %v2040, 0.044715
        %v2051 = vmul.f32 %v2047, %v2029
        %v2052 = vmul.f32 %v2048, %v2032
        %v2053 = vmul.f32 %v2049, %v2037
        %v2054 = vmul.f32 %v2050, %v2040
        %v2055 = vmul.f32 %v2051, %v2029
        %v2056 = vmul.f32 %v2052, %v2032
        %v2057 = vmul.f32 %v2053, %v2037
        %v2058 = vmul.f32 %v2054, %v2040
        %v2059 = vadd.f32 %v2029, %v2055
        %v2060 = vadd.f32 %v2032, %v2056
        %v2061 = vadd.f32 %v2037, %v2057
        %v2062 = vadd.f32 %v2040, %v2058
        %v2063 = vmul.f32 %v2059, 0.7978846
        %v2064 = vmul.f32 %v2060, 0.7978846
        %v2065 = vmul.f32 %v2061, 0.7978846
        %v2066 = vmul.f32 %v2062, 0.7978846
        %v2067 = vtanh.pop %v2063
        %v2068 = vtanh.pop %v2064
        %v2069 = vtanh.pop %v2065
        %v2070 = vtanh.pop %v2066
        %v2071 = vadd.f32 %v2067, 1.0
        %v2072 = vadd.f32 %v2068, 1.0
        %v2073 = vadd.f32 %v2069, 1.0
        %v2074 = vadd.f32 %v2070, 1.0
        %v2075 = vmul.f32 %v2043, %v2071
        %v2076 = vmul.f32 %v2044, %v2072
        %v2077 = vmul.f32 %v2045, %v2073
        %v2078 = vmul.f32 %v2046, %v2074
        %v2079 = vpack.c.bf16 %v2076, %v2075
        %v2080 = vpack.c.bf16 %v2078, %v2077
        %v2081 = vld [vmem:[%s743] sm:$0xf]
        %v2082 = vld [vmem:[%s743 + $0x4] sm:$0xf]
        %v2083 = vld [vmem:[%s743 + $0x8] sm:$0xf]
        %v2084 = vld [vmem:[%s743 + $0xc] sm:$0xf]
        %v2085 = vld [vmem:[%s743 + $0x10] sm:$0xf]
        %v2086 = vld [vmem:[%s743 + $0x14] sm:$0xf]
        %v2087 = vld [vmem:[%s743 + $0x18] sm:$0xf]
        %v2088 = vld [vmem:[%s743 + $0x1c] sm:$0xf]
        %v2089 = vld [vmem:[%s743 + $0x20] sm:$0xf]
        %v2090 = vld [vmem:[%s743 + $0x24] sm:$0xf]
        %v2091 = vld [vmem:[%s743 + $0x28] sm:$0xf]
        %v2092 = vld [vmem:[%s743 + $0x2c] sm:$0xf]
        %v2093 = vld [vmem:[%s743 + $0x30] sm:$0xf]
        %v2094 = vld [vmem:[%s743 + $0x34] sm:$0xf]
        %v2095 = vld [vmem:[%s743 + $0x38] sm:$0xf]
        %v2096 = vld [vmem:[%s743 + $0x3c] sm:$0xf]
        %v2097 = vld [vmem:[%s746] sm:$0x1]
        %v2099 = vlaneseq
        %v2100 = vshrl.u32 %v2099, 7
        %v2101 = vsub.s32 0, %v2100
        %v2102 = vrot.slane %v2097, %v2101
        %v2120 = vunpack.c.l.b16 %v2081
        %v2121 = vunpack.c.l.b16 %v2082
        %v2122 = vunpack.c.l.b16 %v2083
        %v2123 = vunpack.c.l.b16 %v2084
        %v2124 = vunpack.c.l.b16 %v2085
        %v2125 = vunpack.c.l.b16 %v2086
        %v2126 = vunpack.c.l.b16 %v2087
        %v2127 = vunpack.c.l.b16 %v2088
        %v2128 = vunpack.c.l.b16 %v2089
        %v2129 = vunpack.c.l.b16 %v2090
        %v2130 = vunpack.c.l.b16 %v2091
        %v2131 = vunpack.c.l.b16 %v2092
        %v2132 = vunpack.c.l.b16 %v2093
        %v2133 = vunpack.c.l.b16 %v2094
        %v2134 = vunpack.c.l.b16 %v2095
        %v2135 = vunpack.c.l.b16 %v2096
        %v2136 = vpack.c.b16 %v2121, %v2120
        %v2137 = vpack.c.b16 %v2123, %v2122
        %v2138 = vpack.c.b16 %v2125, %v2124
        %v2139 = vpack.c.b16 %v2127, %v2126
        %v2140 = vpack.c.b16 %v2129, %v2128
        %v2141 = vpack.c.b16 %v2131, %v2130
        %v2142 = vpack.c.b16 %v2133, %v2132
        %v2143 = vpack.c.b16 %v2135, %v2134
        %2152 = vmatprep.subr.bf16.mxu0 0
        %2153 = vmatpush1.bf16.msra.mxu0 %v2136
        %2154 = vmatprep.subr.bf16.mxu0 0
        %2155 = vmatpush1.bf16.msra.mxu0 %v2137
        %2156 = vmatprep.subr.bf16.mxu0 0
        %2157 = vmatpush1.bf16.msra.mxu0 %v2138
        %2158 = vmatprep.subr.bf16.mxu0 0
        %2159 = vmatpush1.bf16.msra.mxu0 %v2139
        %2160 = vmatprep.subr.bf16.mxu0 0
        %2161 = vmatpush1.bf16.msra.mxu0 %v2140
        %2162 = vmatprep.subr.bf16.mxu0 0
        %2163 = vmatpush1.bf16.msra.mxu0 %v2141
        %2164 = vmatprep.subr.bf16.mxu0 0
        %2165 = vmatpush1.bf16.msra.mxu0 %v2142
        %2166 = vmatprep.subr.bf16.mxu0 0
        %2167 = vmatpush1.bf16.msra.mxu0 %v2143
        %2168 = vmatprep.subr.bf16.mxu0 0
        %2169 = vmatpush1.bf16.msra.mxu0 0
        %2170 = vmatprep.subr.bf16.mxu0 0
        %2171 = vmatpush1.bf16.msra.mxu0 0
        %2172 = vmatprep.subr.bf16.mxu0 0
        %2173 = vmatpush1.bf16.msra.mxu0 0
        %2174 = vmatprep.subr.bf16.mxu0 0
        %2175 = vmatpush1.bf16.msra.mxu0 0
        %2176 = vmatprep.subr.bf16.mxu0 0
        %2177 = vmatpush1.bf16.msra.mxu0 0
        %2178 = vmatprep.subr.bf16.mxu0 0
        %2179 = vmatpush1.bf16.msra.mxu0 0
        %2180 = vmatprep.subr.bf16.mxu0 0
        %2181 = vmatpush1.bf16.msra.mxu0 0
        %2182 = vmatprep.subr.bf16.mxu0 0
        %2183 = vmatpush1.bf16.msra.mxu0 0
        %2184 = vmatprep.mubr.bf16.mxu0 0
        %2185 = vmatmul.mubr.bf16.gmra.mrb[0].mxu0 %v2079
        %v2186 = vpop.f32.mrb[0].mxu0
        %v2187 = vadd.f32 %v2102, %v2186
        %v2188 = vpop.f32.mrb[0].mxu0
        %v2189 = vpop.f32.mrb[0].mxu0
        %v2190 = vadd.f32 %v2102, %v2189
        %v2191 = vpop.f32.mrb[0].mxu0
        %2192 = vmatprep.mubr.bf16.mxu0 0
        %2193 = vmatmul.mubr.bf16.gmra.mrb[0].mxu0 %v2080
        %v2194 = vpop.f32.mrb[0].mxu0
        %v2195 = vadd.f32 %v2102, %v2194
        %v2196 = vpop.f32.mrb[0].mxu0
        %v2197 = vpop.f32.mrb[0].mxu0
        %v2198 = vadd.f32 %v2102, %v2197
        %v2199 = vpop.f32.mrb[0].mxu0
        %2200 = vdwg.mxu0
        %v2201 = vadd.f32 %v2187, %v1943
        %v2202 = vadd.f32 %v2190, %v1944
        %v2203 = vadd.f32 %v2195, %v1945
        %v2204 = vadd.f32 %v2198, %v1946
        %v2205 = vld [vmem:[%s749] sm:$0x1]
        %v2206 = vld [vmem:[%s752] sm:$0x1]
        %v2207 = vsel %vm908, %v2201, 0.0
        %2208 = vadd.xlane.f32.xlu0 %v2207
        %v2209 = vpop.xlane.xlu0 %2208
        %v2210 = vsel %vm908, %v2202, 0.0
        %2211 = vadd.xlane.f32.xlu0 %v2210
        %v2212 = vpop.xlane.xlu0 %2211
        %v2213 = vsel %vm908, %v2203, 0.0
        %2214 = vadd.xlane.f32.xlu0 %v2213
        %v2215 = vpop.xlane.xlu0 %2214
        %v2216 = vsel %vm908, %v2204, 0.0
        %2217 = vadd.xlane.f32.xlu0 %v2216
        %v2218 = vpop.xlane.xlu0 %2217
        %v2219 = vmul.f32 %v2209, %v1886
        %v2220 = vmul.f32 %v2212, %v1886
        %v2221 = vmul.f32 %v2215, %v1886
        %v2222 = vmul.f32 %v2218, %v1886
        %v2223 = vsub.f32 %v2201, %v2219
        %v2224 = vsub.f32 %v2202, %v2220
        %v2225 = vsub.f32 %v2203, %v2221
        %v2226 = vsub.f32 %v2204, %v2222
        %v2227 = vmul.f32 %v2223, %v2223
        %v2228 = vmul.f32 %v2224, %v2224
        %v2229 = vmul.f32 %v2225, %v2225
        %v2230 = vmul.f32 %v2226, %v2226
        %v2231 = vsel %vm908, %v2227, 0.0
        %2232 = vadd.xlane.f32.xlu0 %v2231
        %v2233 = vpop.xlane.xlu0 %2232
        %v2234 = vsel %vm908, %v2228, 0.0
        %2235 = vadd.xlane.f32.xlu0 %v2234
        %v2236 = vpop.xlane.xlu0 %2235
        %v2237 = vsel %vm908, %v2229, 0.0
        %2238 = vadd.xlane.f32.xlu0 %v2237
        %v2239 = vpop.xlane.xlu0 %2238
        %v2240 = vsel %vm908, %v2230, 0.0
        %2241 = vadd.xlane.f32.xlu0 %v2240
        %v2242 = vpop.xlane.xlu0 %2241
        %v2243 = vmul.f32 %v2233, %v1886
        %v2244 = vmul.f32 %v2236, %v1886
        %v2245 = vmul.f32 %v2239, %v1886
        %v2246 = vmul.f32 %v2242, %v1886
        %v2247 = vadd.f32 %v2243, 1e-12
        %v2248 = vadd.f32 %v2244, 1e-12
        %v2249 = vadd.f32 %v2245, 1e-12
        %v2250 = vadd.f32 %v2246, 1e-12
        %v2251 = vrsqrt.pop %v2247
        %v2252 = vrsqrt.pop %v2248
        %v2253 = vrsqrt.pop %v2249
        %v2254 = vrsqrt.pop %v2250
        %v2255 = vmul.f32 %v2223, %v2251
        %v2256 = vmul.f32 %v2224, %v2252
        %v2257 = vmul.f32 %v2225, %v2253
        %v2258 = vmul.f32 %v2226, %v2254
        %v2260 = vlaneseq
        %v2261 = vshrl.u32 %v2260, 7
        %v2262 = vsub.s32 0, %v2261
        %v2263 = vrot.slane %v2205, %v2262
        %v2265 = vmul.f32 %v2255, %v2263
        %v2266 = vmul.f32 %v2256, %v2263
        %v2267 = vmul.f32 %v2257, %v2263
        %v2268 = vmul.f32 %v2258, %v2263
        %v2270 = vlaneseq
        %v2271 = vshrl.u32 %v2270, 7
        %v2272 = vsub.s32 0, %v2271
        %v2273 = vrot.slane %v2206, %v2272
        %v2275 = vadd.f32 %v2265, %v2273
        %v2276 = vadd.f32 %v2266, %v2273
        %v2277 = vadd.f32 %v2267, %v2273
        %v2278 = vadd.f32 %v2268, %v2273
        %2279 = vst.msk [vmem:[#allocation2] sm:$0xff] %vm908, %v2275
        %2280 = vst.msk [vmem:[#allocation2 + $0x8] sm:$0xff] %vm908, %v2276
        %2281 = vst.msk [vmem:[#allocation2 + $0x10] sm:$0xff] %vm908, %v2277
        %2282 = vst.msk [vmem:[#allocation2 + $0x18] sm:$0xff] %vm908, %v2278
        %p2283 = scmp.eq.s32.totalorder %s31, 1
        // Predicated region
        $region109: #{tpu_custom_call.1} parent=83 // pred_check
          %p2284 = pneg %p2283
        $region110: #{tpu_custom_call.1} parent=83 // pred_check_branch
          %2286 = sbr.rel (%p2284) target = $region112
        $region111: #{tpu_custom_call.1} parent=83 // pred_region
          %2287 = vst.msk [vmem:[#allocation12] sm:$0xff] %vm908, %v2275
          %2288 = vst.msk [vmem:[#allocation12 + $0x8] sm:$0xff] %vm908, %v2276
          %2289 = vst.msk [vmem:[#allocation12 + $0x10] sm:$0xff] %vm908, %v2277
          %2290 = vst.msk [vmem:[#allocation12 + $0x18] sm:$0xff] %vm908, %v2278
        $region112: #{tpu_custom_call.1} parent=83 // pred_fallthru
          _
        // Predicated region
        $region113: #{tpu_custom_call.1} parent=83 // pred_check
          %p2291 = pneg %p440
        $region114: #{tpu_custom_call.1} parent=83 // pred_check_branch
          %2293 = sbr.rel (%p2291) target = $region116
        $region115: #{tpu_custom_call.1} parent=83 // pred_region
          %s2295 = ssub.s32 512, 512
          %2296 = vsyncadd [#allocation5], %s2295
          %s2297 = sshll.u32 [#allocation12], 4
          %s2298 = int_to_ptr.vmem [resolvable:$true] %s2297
          %2303 = dma.vmem_to_hbm [thread:$0]  %s2298, 512, %s16, [#allocation5], 128, 128, 8
        $region116: #{tpu_custom_call.1} parent=83 // pred_fallthru
          _
        // Predicated region
        $region117: #{tpu_custom_call.1} parent=83 // pred_check
          %p2304 = pneg %p440
        $region118: #{tpu_custom_call.1} parent=83 // pred_check_branch
          %2306 = sbr.rel (%p2304) target = $region120
        $region119: #{tpu_custom_call.1} parent=83 // pred_region
          %2307 = dma.done [#allocation5], 512
        $region120: #{tpu_custom_call.1} parent=83 // pred_fallthru
          _
      $region84: #{tpu_custom_call.1} parent=5 // pred_fallthru
        _
      %p2308 = scmp.le.s32.totalorder 2, %s26
      // Predicated region
      $region121: #{tpu_custom_call.1} parent=5 // pred_check
        %p2309 = pneg %p2308
      $region122: #{tpu_custom_call.1} parent=5 // pred_check_branch
        %2311 = sbr.rel (%p2309) target = $region124
      $region123: #{tpu_custom_call.1} parent=5 // pred_region
        %s2312 = ssub.s32 %s26, 2
      $region124: #{tpu_custom_call.1} parent=5 // pred_fallthru
        _
    $region6: #{tpu_custom_call.1} parent=1 // loop_footer
      %s30 = sadd.s32 1, %s26
    $region7: #{tpu_custom_call.1} parent=1 // loop_footer_branch
      %25 = sbr.rel target = $region3
    $region8: #{tpu_custom_call.1} parent=1 // loop_exit
      _
    %2313 = vsyncpa [#allocation4], 1
    %s2314 = scalar_lea.sflag [#allocation4], 1
    %2315 = vsyncpa %s2314, 1
    %2316 = vsyncpa [#allocation7], 1
    %2317 = vsyncpa [#allocation10], 1
    %2318 = vsyncpa [#allocation5], 1
    %s2319 = scalar_lea.sflag [#allocation5], 1
    %2320 = vsyncpa %s2319, 1

</llo_original>
